<compile_context>
chip_gen: v5e
topology: v5e:2x2
jax: 0.10.0
libtpu: 0.0.40
codegen_flags: <defaults>
</compile_context>

<pallas_src>
import jax
import jax.numpy as jnp
from jax.experimental import pallas as pl

EPS = 1e-5


# ----------------------------------------------------------------------------
# Fused kernel: whole forward pass, batch folded into M, everything in VMEM.
# ----------------------------------------------------------------------------
def fused_kernel(p1_ref, w1_ref, b1_ref, w2_ref, b2_ref, bn_ref, resw_ref,
                 w4_ref, b4_ref, mask_ref, wh_ref, sel_ref,
                 fb1_ref, fw2_ref, fb2_ref, out_ref):
    """p1_ref : (B*L2, K2*K1*Cin) composed-receptive-field patches
       w1_ref : (K2*K1*Cin, K2*RC) block-diag folded bnf+conv1+bn1 weights
       b1_ref : (1, K2*RC), w2_ref: (K2*RC, RC), b2_ref: (1, RC)
       bn_ref : (12, RC) rows = [s_a, t_a, s_b, t_b] per residual block
       resw_ref: (6, 3*RC, RC) per-conv tap-concat weights
       w4_ref : (3*RC, C4), b4_ref: (1, C4)
       mask_ref: (B*L2, 2) [not-first-in-batch, not-last-in-batch] row masks
       wh_ref : (C4, B*L2, FU) per-row fn1 weights (flatten folded in)
       sel_ref: (B, B*L2) 0/1 batch-selection matrix
       fb1_ref: (1, FU), fw2_ref: (FU, OUT), fb2_ref: (1, OUT)
       out_ref: (B, OUT) softmax probabilities
    """
    RC = w2_ref.shape[1]
    n_blocks = resw_ref.shape[0] // 2
    f32 = jnp.float32

    # ---- stem: bnf+conv1+bn1+ReLU at the 4 conv2 tap positions (block-diag
    # weight), then conv2 -- both batch-folded (M = B*L2) matmuls. ------------
    h1 = jnp.maximum(
        jnp.dot(p1_ref[...], w1_ref[...], preferred_element_type=f32)
        + b1_ref[...], 0.0)                                   # (D, 4*RC)
    a = jnp.dot(h1, w2_ref[...], preferred_element_type=f32) + b2_ref[...]

    # per-row boundary masks (zero taps that would cross a batch boundary)
    msk = mask_ref[...]
    not_first = msk[:, 0:1]                                   # (D, 1)
    not_last = msk[:, 1:2]

    zrow = jnp.zeros((1, RC), f32)

    def shift_down(u):      # row m -> u[m-1], row 0 -> 0
        return jnp.concatenate([zrow, u[:-1, :]], axis=0)

    def shift_up(u):        # row m -> u[m+1], last row -> 0
        return jnp.concatenate([u[1:, :], zrow], axis=0)

    def conv3_pad1(u, w):   # k=3, pad=1 conv as ONE (D, 3*RC) @ (3*RC, RC) matmul
        taps = jnp.concatenate(
            [shift_down(u) * not_first, u, shift_up(u) * not_last], axis=-1)
        return jnp.dot(taps, w, preferred_element_type=f32)

    # ---- 3 pre-activation residual blocks -----------------------------------
    for blk in range(n_blocks):
        s_a = bn_ref[4 * blk + 0:4 * blk + 1, :]
        t_a = bn_ref[4 * blk + 1:4 * blk + 2, :]
        s_b = bn_ref[4 * blk + 2:4 * blk + 3, :]
        t_b = bn_ref[4 * blk + 3:4 * blk + 4, :]
        u = jnp.maximum(a * s_a + t_a, 0.0)
        v = conv3_pad1(u, resw_ref[2 * blk])
        w = jnp.maximum(v * s_b + t_b, 0.0)
        a = a + conv3_pad1(w, resw_ref[2 * blk + 1])

    # ---- block4: valid k=3 conv (RC -> C4); junk rows are zeroed via wh -----
    t1 = shift_up(a)
    t2 = shift_up(t1)                                         # row m -> a[m+2]
    taps4 = jnp.concatenate([a, t1, t2], axis=-1)             # (D, 3*RC)
    y4 = jnp.dot(taps4, w4_ref[...], preferred_element_type=f32) + b4_ref[...]

    # ---- channel-major flatten + fn1, composed as per-row weights + a 0/1
    # batch-selection matmul (no in-kernel transpose / reshape needed). -------
    C4 = y4.shape[1]
    q = y4[:, 0:1] * wh_ref[0]
    for c in range(1, C4):
        q = q + y4[:, c:c + 1] * wh_ref[c]                    # (D, FU)
    z1 = jnp.maximum(
        jnp.dot(sel_ref[...], q, preferred_element_type=f32) + fb1_ref[...],
        0.0)                                                  # (B, FU)
    z2 = jnp.dot(z1, fw2_ref[...], preferred_element_type=f32) + fb2_ref[...]

    z2 = z2 - jnp.max(z2, axis=-1, keepdims=True)
    e = jnp.exp(z2)
    out_ref[...] = (e / jnp.sum(e, axis=-1, keepdims=True)).astype(out_ref.dtype)


# ----------------------------------------------------------------------------
# Wrapper: parameter folding into kernel layouts + single pallas_call.
# ----------------------------------------------------------------------------
def _bn_scale_shift(g, b, m, v):
    s = g / jnp.sqrt(v + EPS)
    return s, b - m * s


def pure_cnn_forward(x, p):
    """x: (B, Cin, L) float32. Returns softmax probabilities (B, output_size)."""
    B, Cin, L = x.shape
    RC = p["conv1_w"].shape[0]
    K1 = p["conv1_w"].shape[2]       # 4
    K2 = p["conv2_w"].shape[2]       # 4
    C4 = p["w4"].shape[0]
    FU = p["fn1_w"].shape[0]
    OUT = p["fn2_w"].shape[0]

    L1 = (L - K1) // 2 + 1
    L2 = (L1 - K2) // 2 + 1
    L4 = L2 - 2
    D = B * L2
    assert p["fn1_w"].shape[1] == C4 * L4  # feature_size consistency
    f32 = jnp.float32

    # ---- fold bnf -> conv1 -> bn1, block-diagonal over the K2 conv2 taps ----
    sf, tf = _bn_scale_shift(*p["bnf"])
    s1, t1 = _bn_scale_shift(*p["bn1"])
    w1 = p["conv1_w"] * sf[None, :, None] * s1[:, None, None]
    b1 = (p["conv1_b"]
          + jnp.sum(p["conv1_w"] * tf[None, :, None], axis=(1, 2))) * s1 + t1
    w1mat = jnp.transpose(w1, (2, 1, 0)).reshape(K1 * Cin, RC)
    KC = K1 * Cin
    w1blk = jnp.zeros((K2 * KC, K2 * RC), f32)
    for j in range(K2):
        w1blk = w1blk.at[j * KC:(j + 1) * KC, j * RC:(j + 1) * RC].set(w1mat)
    b1cat = jnp.tile(b1, K2).reshape(1, K2 * RC)

    w2mat = jnp.transpose(p["conv2_w"], (2, 1, 0)).reshape(K2 * RC, RC)
    b2row = p["conv2_b"].reshape(1, RC)

    # ---- residual block parameters: per-conv (3*RC, RC) tap-concat weights --
    bn_rows, res_w = [], []
    for blk in p["blocks"]:
        sa, ta = _bn_scale_shift(*blk["bn_a"])
        sb, tb = _bn_scale_shift(*blk["bn_b"])
        bn_rows += [sa, ta, sb, tb]
        res_w.append(jnp.transpose(blk["conv_a"], (2, 1, 0)).reshape(3 * RC, RC))
        res_w.append(jnp.transpose(blk["conv_b"], (2, 1, 0)).reshape(3 * RC, RC))
    bn_mat = jnp.stack(bn_rows, axis=0)                       # (12, RC)
    res_w = jnp.stack(res_w, axis=0)                          # (6, 3*RC, RC)

    # ---- block4 + head parameters -------------------------------------------
    w4cat = jnp.transpose(p["w4"], (2, 1, 0)).reshape(3 * RC, C4)
    b4row = p["b4"].reshape(1, C4)

    # Fold the channel-major flatten into per-row fn1 weights: row m (local
    # position i = m mod L2) of block4 channel c multiplies fn1_w[:, c*L4 + i];
    # rows with i >= L4 (invalid valid-conv outputs) get zero weights.
    wh_rows = []
    for c in range(C4):
        wc = p["fn1_w"][:, c * L4:(c + 1) * L4].T             # (L4, FU)
        wc = jnp.concatenate([wc, jnp.zeros((L2 - L4, FU), f32)], axis=0)
        wh_rows.append(jnp.tile(wc, (B, 1)))                  # (D, FU)
    wh = jnp.stack(wh_rows, axis=0)                           # (C4, D, FU)
    sel = jnp.repeat(jnp.eye(B, dtype=f32), L2, axis=1)       # (B, D) 0/1
    fb1 = p["fn1_b"].reshape(1, FU)
    fw2 = p["fn2_w"].T                                        # (FU, OUT)
    fb2 = p["fn2_b"].reshape(1, OUT)

    # per-row tap masks for the pad=1 convs in the batch-folded layout
    local = jnp.arange(D) % L2
    mask = jnp.stack([(local != 0).astype(f32),
                      (local != L2 - 1).astype(f32)], axis=1)  # (D, 2)

    # ---- composed-receptive-field patches: row (b, i) holds, for every conv2
    # tap j, the conv1 input window at x positions 4*i + 2*j + j' (channel-minor)
    x_cl = jnp.transpose(x, (0, 2, 1))                        # (B, L, Cin)
    taps = []
    for j in range(K2):
        for jp in range(K1):
            o = 2 * j + jp
            taps.append(x_cl[:, o:o + 4 * (L2 - 1) + 1:4, :])  # (B, L2, Cin)
    p1cat = jnp.concatenate(taps, axis=-1).reshape(D, K2 * K1 * Cin)

    # ---- single fused pallas_call (all operands whole-array VMEM resident) --
    return pl.pallas_call(
        fused_kernel,
        out_shape=jax.ShapeDtypeStruct((B, OUT), f32),
    )(p1cat, w1blk, b1cat, w2mat, b2row, bn_mat, res_w, w4cat, b4row,
      mask, wh, sel, fb1, fw2, fb2)


# ----------------------------------------------------------------------------
# Pure-JAX reference (mirrors PyTorch forward, inference-mode BN)
# ----------------------------------------------------------------------------
def reference_forward(x, p):
    hp = jax.lax.Precision.HIGHEST

    def bn(h, g, b, m, v):
        s = g / jnp.sqrt(v + EPS)
        return h * s[None, :, None] + (b - m * s)[None, :, None]

    def conv(h, w, b, stride, pad):
        y = jax.lax.conv_general_dilated(
            h, w, window_strides=(stride,), padding=[(pad, pad)],
            dimension_numbers=("NCH", "OIH", "NCH"), precision=hp)
        return y if b is None else y + b[None, :, None]

    h = bn(x, *p["bnf"])
    h = conv(h, p["conv1_w"], p["conv1_b"], 2, 0)
    h = jax.nn.relu(bn(h, *p["bn1"]))
    h = conv(h, p["conv2_w"], p["conv2_b"], 2, 0)
    for blk in p["blocks"]:
        t = h
        h = jax.nn.relu(bn(h, *blk["bn_a"]))
        h = conv(h, blk["conv_a"], None, 1, 1)
        h = jax.nn.relu(bn(h, *blk["bn_b"]))
        h = conv(h, blk["conv_b"], None, 1, 1)
        h = h + t
    h = conv(h, p["w4"], p["b4"], 1, 0)                        # (B, 2, L4)
    f = h.reshape(h.shape[0], -1)                              # channel-major flatten
    f = jax.nn.relu(jnp.dot(f, p["fn1_w"].T, precision=hp) + p["fn1_b"])
    z = jnp.dot(f, p["fn2_w"].T, precision=hp) + p["fn2_b"]
    return jax.nn.softmax(z, axis=-1)


# ----------------------------------------------------------------------------
# Deterministic parameter init (PyTorch-layout weights)
# ----------------------------------------------------------------------------
def init_params(key, in_ch, rc, fu, out_size, l4):
    feat = 2 * l4
    keys = iter(jax.random.split(key, 64))

    def nrm(shape, scale=1.0):
        return scale * jax.random.normal(next(keys), shape, jnp.float32)

    def bn_p(c):
        return (1.0 + 0.1 * nrm((c,)),                                   # gamma
                0.1 * nrm((c,)),                                         # beta
                0.1 * nrm((c,)),                                         # running mean
                0.5 + jax.random.uniform(next(keys), (c,), jnp.float32))  # running var

    return {
        "bnf": bn_p(in_ch),
        "conv1_w": nrm((rc, in_ch, 4), (in_ch * 4) ** -0.5),
        "conv1_b": nrm((rc,), 0.05),
        "bn1": bn_p(rc),
        "conv2_w": nrm((rc, rc, 4), (rc * 4) ** -0.5),
        "conv2_b": nrm((rc,), 0.05),
        "blocks": [
            {"bn_a": bn_p(rc),
             "conv_a": nrm((rc, rc, 3), (rc * 3) ** -0.5),
             "bn_b": bn_p(rc),
             "conv_b": nrm((rc, rc, 3), (rc * 3) ** -0.5)}
            for _ in range(3)
        ],
        "w4": nrm((2, rc, 3), (rc * 3) ** -0.5),
        "b4": nrm((2,), 0.05),
        "fn1_w": nrm((fu, feat), feat ** -0.5),
        "fn1_b": nrm((fu,), 0.05),
        "fn2_w": nrm((out_size, fu), fu ** -0.5),
        "fn2_b": nrm((out_size,), 0.05),
    }


if __name__ == "__main__":
    # Small shapes consistent with PureCNN: batch=2, in_channel=3, seq=64,
    # residual_channel=128, fully_unit=256, output_size=2.
    B, CIN, L = 2, 3, 64
    RC, FU, OUT = 128, 256, 2
    L1 = (L - 4) // 2 + 1          # 31
    L2 = (L1 - 4) // 2 + 1         # 14
    L4 = L2 - 2                    # 12 -> feature_size = 2 * 12 = 24

    key = jax.random.PRNGKey(0)
    kx, kp = jax.random.split(key)
    x = jax.random.normal(kx, (B, CIN, L), jnp.float32)
    params = init_params(kp, CIN, RC, FU, OUT, L4)

    out = jax.jit(pure_cnn_forward)(x, params)
    jax.block_until_ready(out)

    ref = reference_forward(x, params)
    assert out.shape == (B, OUT), out.shape
    assert bool(jnp.all(jnp.isfinite(out)))
    assert jnp.allclose(jnp.sum(out, axis=-1), 1.0, atol=1e-5)
    assert jnp.allclose(out, ref, atol=5e-3, rtol=5e-3), (out, ref)
    print("KERNEL_OK")
</pallas_src>

<mosaic_0001>
module attributes {stable_mosaic.version = 11 : i64} {
  func.func @fused_kernel(%arg0: memref<28x48xf32, #tpu.memory_space<vmem>>, %arg1: memref<48x512xf32, #tpu.memory_space<vmem>>, %arg2: memref<1x512xf32, #tpu.memory_space<vmem>>, %arg3: memref<512x128xf32, #tpu.memory_space<vmem>>, %arg4: memref<1x128xf32, #tpu.memory_space<vmem>>, %arg5: memref<12x128xf32, #tpu.memory_space<vmem>>, %arg6: memref<6x384x128xf32, #tpu.memory_space<vmem>>, %arg7: memref<384x2xf32, #tpu.memory_space<vmem>>, %arg8: memref<1x2xf32, #tpu.memory_space<vmem>>, %arg9: memref<28x2xf32, #tpu.memory_space<vmem>>, %arg10: memref<2x28x256xf32, #tpu.memory_space<vmem>>, %arg11: memref<2x28xf32, #tpu.memory_space<vmem>>, %arg12: memref<1x256xf32, #tpu.memory_space<vmem>>, %arg13: memref<256x2xf32, #tpu.memory_space<vmem>>, %arg14: memref<1x2xf32, #tpu.memory_space<vmem>>, %arg15: memref<2x2xf32, #tpu.memory_space<vmem>>) attributes {dimension_semantics = [], scalar_prefetch = 0 : i64, scratch_operands = 0 : i64, tpu.core_type = #tpu.core_type<tc>} {
    %c0 = arith.constant 0 : index
    %c0_0 = arith.constant 0 : index
    %0 = vector.load %arg0[%c0, %c0_0] : memref<28x48xf32, #tpu.memory_space<vmem>>, vector<28x48xf32>
    %c0_1 = arith.constant 0 : index
    %c0_2 = arith.constant 0 : index
    %1 = vector.load %arg1[%c0_1, %c0_2] : memref<48x512xf32, #tpu.memory_space<vmem>>, vector<48x512xf32>
    %cst = arith.constant dense<0.000000e+00> : vector<28x512xf32>
    %2 = tpu.matmul %0, %1, %cst {dimension_numbers = #tpu.dot_dimension_numbers<[1], [0], [0], [1], [0, 0, 1, 1], [], []>} : vector<28x48xf32>, vector<48x512xf32>, vector<28x512xf32> -> vector<28x512xf32>
    %c0_3 = arith.constant 0 : index
    %c0_4 = arith.constant 0 : index
    %3 = vector.load %arg2[%c0_3, %c0_4] : memref<1x512xf32, #tpu.memory_space<vmem>>, vector<1x512xf32>
    %4 = vector.broadcast %3 : vector<1x512xf32> to vector<28x512xf32>
    %5 = arith.addf %2, %4 : vector<28x512xf32>
    %cst_5 = arith.constant 0.000000e+00 : f32
    %6 = vector.broadcast %cst_5 : f32 to vector<28x512xf32>
    %7 = arith.maximumf %5, %6 : vector<28x512xf32>
    %c0_6 = arith.constant 0 : index
    %c0_7 = arith.constant 0 : index
    %8 = vector.load %arg3[%c0_6, %c0_7] : memref<512x128xf32, #tpu.memory_space<vmem>>, vector<512x128xf32>
    %cst_8 = arith.constant dense<0.000000e+00> : vector<28x128xf32>
    %9 = tpu.matmul %7, %8, %cst_8 {dimension_numbers = #tpu.dot_dimension_numbers<[1], [0], [0], [1], [0, 0, 1, 1], [], []>} : vector<28x512xf32>, vector<512x128xf32>, vector<28x128xf32> -> vector<28x128xf32>
    %c0_9 = arith.constant 0 : index
    %c0_10 = arith.constant 0 : index
    %10 = vector.load %arg4[%c0_9, %c0_10] : memref<1x128xf32, #tpu.memory_space<vmem>>, vector<1x128xf32>
    %11 = vector.broadcast %10 : vector<1x128xf32> to vector<28x128xf32>
    %12 = arith.addf %9, %11 : vector<28x128xf32>
    %c0_11 = arith.constant 0 : index
    %c0_12 = arith.constant 0 : index
    %13 = vector.load %arg9[%c0_11, %c0_12] : memref<28x2xf32, #tpu.memory_space<vmem>>, vector<28x2xf32>
    %14 = vector.extract_strided_slice %13 {offsets = [0, 0], sizes = [28, 1], strides = [1, 1]} : vector<28x2xf32> to vector<28x1xf32>
    %15 = vector.extract_strided_slice %13 {offsets = [0, 1], sizes = [28, 1], strides = [1, 1]} : vector<28x2xf32> to vector<28x1xf32>
    %cst_13 = arith.constant 0.000000e+00 : f32
    %16 = vector.broadcast %cst_13 : f32 to vector<1x128xf32>
    %c0_14 = arith.constant 0 : index
    %c0_15 = arith.constant 0 : index
    %17 = vector.load %arg5[%c0_14, %c0_15] : memref<12x128xf32, #tpu.memory_space<vmem>>, vector<1x128xf32>
    %c1 = arith.constant 1 : index
    %c0_16 = arith.constant 0 : index
    %18 = vector.load %arg5[%c1, %c0_16] : memref<12x128xf32, #tpu.memory_space<vmem>>, vector<1x128xf32>
    %c2 = arith.constant 2 : index
    %c0_17 = arith.constant 0 : index
    %19 = vector.load %arg5[%c2, %c0_17] : memref<12x128xf32, #tpu.memory_space<vmem>>, vector<1x128xf32>
    %c3 = arith.constant 3 : index
    %c0_18 = arith.constant 0 : index
    %20 = vector.load %arg5[%c3, %c0_18] : memref<12x128xf32, #tpu.memory_space<vmem>>, vector<1x128xf32>
    %21 = vector.broadcast %17 : vector<1x128xf32> to vector<28x128xf32>
    %22 = arith.mulf %12, %21 : vector<28x128xf32>
    %23 = vector.broadcast %18 : vector<1x128xf32> to vector<28x128xf32>
    %24 = arith.addf %22, %23 : vector<28x128xf32>
    %cst_19 = arith.constant 0.000000e+00 : f32
    %25 = vector.broadcast %cst_19 : f32 to vector<28x128xf32>
    %26 = arith.maximumf %24, %25 : vector<28x128xf32>
    %c0_20 = arith.constant 0 : index
    %c0_21 = arith.constant 0 : index
    %c0_22 = arith.constant 0 : index
    %27 = vector.load %arg6[%c0_20, %c0_21, %c0_22] : memref<6x384x128xf32, #tpu.memory_space<vmem>>, vector<1x384x128xf32>
    %28 = vector.shape_cast %27 : vector<1x384x128xf32> to vector<384x128xf32>
    %29 = vector.extract_strided_slice %26 {offsets = [0, 0], sizes = [27, 128], strides = [1, 1]} : vector<28x128xf32> to vector<27x128xf32>
    %30 = tpu.concatenate %16, %29 in 0 : vector<1x128xf32>, vector<27x128xf32> -> vector<28x128xf32>
    %31 = vector.broadcast %14 : vector<28x1xf32> to vector<28x128xf32>
    %32 = arith.mulf %30, %31 : vector<28x128xf32>
    %33 = vector.extract_strided_slice %26 {offsets = [1, 0], sizes = [27, 128], strides = [1, 1]} : vector<28x128xf32> to vector<27x128xf32>
    %34 = tpu.concatenate %33, %16 in 0 : vector<27x128xf32>, vector<1x128xf32> -> vector<28x128xf32>
    %35 = vector.broadcast %15 : vector<28x1xf32> to vector<28x128xf32>
    %36 = arith.mulf %34, %35 : vector<28x128xf32>
    %37 = tpu.concatenate %32, %26, %36 in 1 : vector<28x128xf32>, vector<28x128xf32>, vector<28x128xf32> -> vector<28x384xf32>
    %cst_23 = arith.constant dense<0.000000e+00> : vector<28x128xf32>
    %38 = tpu.matmul %37, %28, %cst_23 {dimension_numbers = #tpu.dot_dimension_numbers<[1], [0], [0], [1], [0, 0, 1, 1], [], []>} : vector<28x384xf32>, vector<384x128xf32>, vector<28x128xf32> -> vector<28x128xf32>
    %39 = vector.broadcast %19 : vector<1x128xf32> to vector<28x128xf32>
    %40 = arith.mulf %38, %39 : vector<28x128xf32>
    %41 = vector.broadcast %20 : vector<1x128xf32> to vector<28x128xf32>
    %42 = arith.addf %40, %41 : vector<28x128xf32>
    %cst_24 = arith.constant 0.000000e+00 : f32
    %43 = vector.broadcast %cst_24 : f32 to vector<28x128xf32>
    %44 = arith.maximumf %42, %43 : vector<28x128xf32>
    %c1_25 = arith.constant 1 : index
    %c0_26 = arith.constant 0 : index
    %c0_27 = arith.constant 0 : index
    %45 = vector.load %arg6[%c1_25, %c0_26, %c0_27] : memref<6x384x128xf32, #tpu.memory_space<vmem>>, vector<1x384x128xf32>
    %46 = vector.shape_cast %45 : vector<1x384x128xf32> to vector<384x128xf32>
    %47 = vector.extract_strided_slice %44 {offsets = [0, 0], sizes = [27, 128], strides = [1, 1]} : vector<28x128xf32> to vector<27x128xf32>
    %48 = tpu.concatenate %16, %47 in 0 : vector<1x128xf32>, vector<27x128xf32> -> vector<28x128xf32>
    %49 = vector.broadcast %14 : vector<28x1xf32> to vector<28x128xf32>
    %50 = arith.mulf %48, %49 : vector<28x128xf32>
    %51 = vector.extract_strided_slice %44 {offsets = [1, 0], sizes = [27, 128], strides = [1, 1]} : vector<28x128xf32> to vector<27x128xf32>
    %52 = tpu.concatenate %51, %16 in 0 : vector<27x128xf32>, vector<1x128xf32> -> vector<28x128xf32>
    %53 = vector.broadcast %15 : vector<28x1xf32> to vector<28x128xf32>
    %54 = arith.mulf %52, %53 : vector<28x128xf32>
    %55 = tpu.concatenate %50, %44, %54 in 1 : vector<28x128xf32>, vector<28x128xf32>, vector<28x128xf32> -> vector<28x384xf32>
    %cst_28 = arith.constant dense<0.000000e+00> : vector<28x128xf32>
    %56 = tpu.matmul %55, %46, %cst_28 {dimension_numbers = #tpu.dot_dimension_numbers<[1], [0], [0], [1], [0, 0, 1, 1], [], []>} : vector<28x384xf32>, vector<384x128xf32>, vector<28x128xf32> -> vector<28x128xf32>
    %57 = arith.addf %12, %56 : vector<28x128xf32>
    %c4 = arith.constant 4 : index
    %c0_29 = arith.constant 0 : index
    %58 = vector.load %arg5[%c4, %c0_29] : memref<12x128xf32, #tpu.memory_space<vmem>>, vector<1x128xf32>
    %c5 = arith.constant 5 : index
    %c0_30 = arith.constant 0 : index
    %59 = vector.load %arg5[%c5, %c0_30] : memref<12x128xf32, #tpu.memory_space<vmem>>, vector<1x128xf32>
    %c6 = arith.constant 6 : index
    %c0_31 = arith.constant 0 : index
    %60 = vector.load %arg5[%c6, %c0_31] : memref<12x128xf32, #tpu.memory_space<vmem>>, vector<1x128xf32>
    %c7 = arith.constant 7 : index
    %c0_32 = arith.constant 0 : index
    %61 = vector.load %arg5[%c7, %c0_32] : memref<12x128xf32, #tpu.memory_space<vmem>>, vector<1x128xf32>
    %62 = vector.broadcast %58 : vector<1x128xf32> to vector<28x128xf32>
    %63 = arith.mulf %57, %62 : vector<28x128xf32>
    %64 = vector.broadcast %59 : vector<1x128xf32> to vector<28x128xf32>
    %65 = arith.addf %63, %64 : vector<28x128xf32>
    %cst_33 = arith.constant 0.000000e+00 : f32
    %66 = vector.broadcast %cst_33 : f32 to vector<28x128xf32>
    %67 = arith.maximumf %65, %66 : vector<28x128xf32>
    %c2_34 = arith.constant 2 : index
    %c0_35 = arith.constant 0 : index
    %c0_36 = arith.constant 0 : index
    %68 = vector.load %arg6[%c2_34, %c0_35, %c0_36] : memref<6x384x128xf32, #tpu.memory_space<vmem>>, vector<1x384x128xf32>
    %69 = vector.shape_cast %68 : vector<1x384x128xf32> to vector<384x128xf32>
    %70 = vector.extract_strided_slice %67 {offsets = [0, 0], sizes = [27, 128], strides = [1, 1]} : vector<28x128xf32> to vector<27x128xf32>
    %71 = tpu.concatenate %16, %70 in 0 : vector<1x128xf32>, vector<27x128xf32> -> vector<28x128xf32>
    %72 = vector.broadcast %14 : vector<28x1xf32> to vector<28x128xf32>
    %73 = arith.mulf %71, %72 : vector<28x128xf32>
    %74 = vector.extract_strided_slice %67 {offsets = [1, 0], sizes = [27, 128], strides = [1, 1]} : vector<28x128xf32> to vector<27x128xf32>
    %75 = tpu.concatenate %74, %16 in 0 : vector<27x128xf32>, vector<1x128xf32> -> vector<28x128xf32>
    %76 = vector.broadcast %15 : vector<28x1xf32> to vector<28x128xf32>
    %77 = arith.mulf %75, %76 : vector<28x128xf32>
    %78 = tpu.concatenate %73, %67, %77 in 1 : vector<28x128xf32>, vector<28x128xf32>, vector<28x128xf32> -> vector<28x384xf32>
    %cst_37 = arith.constant dense<0.000000e+00> : vector<28x128xf32>
    %79 = tpu.matmul %78, %69, %cst_37 {dimension_numbers = #tpu.dot_dimension_numbers<[1], [0], [0], [1], [0, 0, 1, 1], [], []>} : vector<28x384xf32>, vector<384x128xf32>, vector<28x128xf32> -> vector<28x128xf32>
    %80 = vector.broadcast %60 : vector<1x128xf32> to vector<28x128xf32>
    %81 = arith.mulf %79, %80 : vector<28x128xf32>
    %82 = vector.broadcast %61 : vector<1x128xf32> to vector<28x128xf32>
    %83 = arith.addf %81, %82 : vector<28x128xf32>
    %cst_38 = arith.constant 0.000000e+00 : f32
    %84 = vector.broadcast %cst_38 : f32 to vector<28x128xf32>
    %85 = arith.maximumf %83, %84 : vector<28x128xf32>
    %c3_39 = arith.constant 3 : index
    %c0_40 = arith.constant 0 : index
    %c0_41 = arith.constant 0 : index
    %86 = vector.load %arg6[%c3_39, %c0_40, %c0_41] : memref<6x384x128xf32, #tpu.memory_space<vmem>>, vector<1x384x128xf32>
    %87 = vector.shape_cast %86 : vector<1x384x128xf32> to vector<384x128xf32>
    %88 = vector.extract_strided_slice %85 {offsets = [0, 0], sizes = [27, 128], strides = [1, 1]} : vector<28x128xf32> to vector<27x128xf32>
    %89 = tpu.concatenate %16, %88 in 0 : vector<1x128xf32>, vector<27x128xf32> -> vector<28x128xf32>
    %90 = vector.broadcast %14 : vector<28x1xf32> to vector<28x128xf32>
    %91 = arith.mulf %89, %90 : vector<28x128xf32>
    %92 = vector.extract_strided_slice %85 {offsets = [1, 0], sizes = [27, 128], strides = [1, 1]} : vector<28x128xf32> to vector<27x128xf32>
    %93 = tpu.concatenate %92, %16 in 0 : vector<27x128xf32>, vector<1x128xf32> -> vector<28x128xf32>
    %94 = vector.broadcast %15 : vector<28x1xf32> to vector<28x128xf32>
    %95 = arith.mulf %93, %94 : vector<28x128xf32>
    %96 = tpu.concatenate %91, %85, %95 in 1 : vector<28x128xf32>, vector<28x128xf32>, vector<28x128xf32> -> vector<28x384xf32>
    %cst_42 = arith.constant dense<0.000000e+00> : vector<28x128xf32>
    %97 = tpu.matmul %96, %87, %cst_42 {dimension_numbers = #tpu.dot_dimension_numbers<[1], [0], [0], [1], [0, 0, 1, 1], [], []>} : vector<28x384xf32>, vector<384x128xf32>, vector<28x128xf32> -> vector<28x128xf32>
    %98 = arith.addf %57, %97 : vector<28x128xf32>
    %c8 = arith.constant 8 : index
    %c0_43 = arith.constant 0 : index
    %99 = vector.load %arg5[%c8, %c0_43] : memref<12x128xf32, #tpu.memory_space<vmem>>, vector<1x128xf32>
    %c9 = arith.constant 9 : index
    %c0_44 = arith.constant 0 : index
    %100 = vector.load %arg5[%c9, %c0_44] : memref<12x128xf32, #tpu.memory_space<vmem>>, vector<1x128xf32>
    %c10 = arith.constant 10 : index
    %c0_45 = arith.constant 0 : index
    %101 = vector.load %arg5[%c10, %c0_45] : memref<12x128xf32, #tpu.memory_space<vmem>>, vector<1x128xf32>
    %c11 = arith.constant 11 : index
    %c0_46 = arith.constant 0 : index
    %102 = vector.load %arg5[%c11, %c0_46] : memref<12x128xf32, #tpu.memory_space<vmem>>, vector<1x128xf32>
    %103 = vector.broadcast %99 : vector<1x128xf32> to vector<28x128xf32>
    %104 = arith.mulf %98, %103 : vector<28x128xf32>
    %105 = vector.broadcast %100 : vector<1x128xf32> to vector<28x128xf32>
    %106 = arith.addf %104, %105 : vector<28x128xf32>
    %cst_47 = arith.constant 0.000000e+00 : f32
    %107 = vector.broadcast %cst_47 : f32 to vector<28x128xf32>
    %108 = arith.maximumf %106, %107 : vector<28x128xf32>
    %c4_48 = arith.constant 4 : index
    %c0_49 = arith.constant 0 : index
    %c0_50 = arith.constant 0 : index
    %109 = vector.load %arg6[%c4_48, %c0_49, %c0_50] : memref<6x384x128xf32, #tpu.memory_space<vmem>>, vector<1x384x128xf32>
    %110 = vector.shape_cast %109 : vector<1x384x128xf32> to vector<384x128xf32>
    %111 = vector.extract_strided_slice %108 {offsets = [0, 0], sizes = [27, 128], strides = [1, 1]} : vector<28x128xf32> to vector<27x128xf32>
    %112 = tpu.concatenate %16, %111 in 0 : vector<1x128xf32>, vector<27x128xf32> -> vector<28x128xf32>
    %113 = vector.broadcast %14 : vector<28x1xf32> to vector<28x128xf32>
    %114 = arith.mulf %112, %113 : vector<28x128xf32>
    %115 = vector.extract_strided_slice %108 {offsets = [1, 0], sizes = [27, 128], strides = [1, 1]} : vector<28x128xf32> to vector<27x128xf32>
    %116 = tpu.concatenate %115, %16 in 0 : vector<27x128xf32>, vector<1x128xf32> -> vector<28x128xf32>
    %117 = vector.broadcast %15 : vector<28x1xf32> to vector<28x128xf32>
    %118 = arith.mulf %116, %117 : vector<28x128xf32>
    %119 = tpu.concatenate %114, %108, %118 in 1 : vector<28x128xf32>, vector<28x128xf32>, vector<28x128xf32> -> vector<28x384xf32>
    %cst_51 = arith.constant dense<0.000000e+00> : vector<28x128xf32>
    %120 = tpu.matmul %119, %110, %cst_51 {dimension_numbers = #tpu.dot_dimension_numbers<[1], [0], [0], [1], [0, 0, 1, 1], [], []>} : vector<28x384xf32>, vector<384x128xf32>, vector<28x128xf32> -> vector<28x128xf32>
    %121 = vector.broadcast %101 : vector<1x128xf32> to vector<28x128xf32>
    %122 = arith.mulf %120, %121 : vector<28x128xf32>
    %123 = vector.broadcast %102 : vector<1x128xf32> to vector<28x128xf32>
    %124 = arith.addf %122, %123 : vector<28x128xf32>
    %cst_52 = arith.constant 0.000000e+00 : f32
    %125 = vector.broadcast %cst_52 : f32 to vector<28x128xf32>
    %126 = arith.maximumf %124, %125 : vector<28x128xf32>
    %c5_53 = arith.constant 5 : index
    %c0_54 = arith.constant 0 : index
    %c0_55 = arith.constant 0 : index
    %127 = vector.load %arg6[%c5_53, %c0_54, %c0_55] : memref<6x384x128xf32, #tpu.memory_space<vmem>>, vector<1x384x128xf32>
    %128 = vector.shape_cast %127 : vector<1x384x128xf32> to vector<384x128xf32>
    %129 = vector.extract_strided_slice %126 {offsets = [0, 0], sizes = [27, 128], strides = [1, 1]} : vector<28x128xf32> to vector<27x128xf32>
    %130 = tpu.concatenate %16, %129 in 0 : vector<1x128xf32>, vector<27x128xf32> -> vector<28x128xf32>
    %131 = vector.broadcast %14 : vector<28x1xf32> to vector<28x128xf32>
    %132 = arith.mulf %130, %131 : vector<28x128xf32>
    %133 = vector.extract_strided_slice %126 {offsets = [1, 0], sizes = [27, 128], strides = [1, 1]} : vector<28x128xf32> to vector<27x128xf32>
    %134 = tpu.concatenate %133, %16 in 0 : vector<27x128xf32>, vector<1x128xf32> -> vector<28x128xf32>
    %135 = vector.broadcast %15 : vector<28x1xf32> to vector<28x128xf32>
    %136 = arith.mulf %134, %135 : vector<28x128xf32>
    %137 = tpu.concatenate %132, %126, %136 in 1 : vector<28x128xf32>, vector<28x128xf32>, vector<28x128xf32> -> vector<28x384xf32>
    %cst_56 = arith.constant dense<0.000000e+00> : vector<28x128xf32>
    %138 = tpu.matmul %137, %128, %cst_56 {dimension_numbers = #tpu.dot_dimension_numbers<[1], [0], [0], [1], [0, 0, 1, 1], [], []>} : vector<28x384xf32>, vector<384x128xf32>, vector<28x128xf32> -> vector<28x128xf32>
    %139 = arith.addf %98, %138 : vector<28x128xf32>
    %140 = vector.extract_strided_slice %139 {offsets = [1, 0], sizes = [27, 128], strides = [1, 1]} : vector<28x128xf32> to vector<27x128xf32>
    %141 = tpu.concatenate %140, %16 in 0 : vector<27x128xf32>, vector<1x128xf32> -> vector<28x128xf32>
    %142 = vector.extract_strided_slice %141 {offsets = [1, 0], sizes = [27, 128], strides = [1, 1]} : vector<28x128xf32> to vector<27x128xf32>
    %143 = tpu.concatenate %142, %16 in 0 : vector<27x128xf32>, vector<1x128xf32> -> vector<28x128xf32>
    %144 = tpu.concatenate %139, %141, %143 in 1 : vector<28x128xf32>, vector<28x128xf32>, vector<28x128xf32> -> vector<28x384xf32>
    %c0_57 = arith.constant 0 : index
    %c0_58 = arith.constant 0 : index
    %145 = vector.load %arg7[%c0_57, %c0_58] : memref<384x2xf32, #tpu.memory_space<vmem>>, vector<384x2xf32>
    %cst_59 = arith.constant dense<0.000000e+00> : vector<28x2xf32>
    %146 = tpu.matmul %144, %145, %cst_59 {dimension_numbers = #tpu.dot_dimension_numbers<[1], [0], [0], [1], [0, 0, 1, 1], [], []>} : vector<28x384xf32>, vector<384x2xf32>, vector<28x2xf32> -> vector<28x2xf32>
    %c0_60 = arith.constant 0 : index
    %c0_61 = arith.constant 0 : index
    %147 = vector.load %arg8[%c0_60, %c0_61] : memref<1x2xf32, #tpu.memory_space<vmem>>, vector<1x2xf32>
    %148 = vector.broadcast %147 : vector<1x2xf32> to vector<28x2xf32>
    %149 = arith.addf %146, %148 : vector<28x2xf32>
    %150 = vector.extract_strided_slice %149 {offsets = [0, 0], sizes = [28, 1], strides = [1, 1]} : vector<28x2xf32> to vector<28x1xf32>
    %c0_62 = arith.constant 0 : index
    %c0_63 = arith.constant 0 : index
    %c0_64 = arith.constant 0 : index
    %151 = vector.load %arg10[%c0_62, %c0_63, %c0_64] : memref<2x28x256xf32, #tpu.memory_space<vmem>>, vector<1x28x256xf32>
    %152 = vector.shape_cast %151 : vector<1x28x256xf32> to vector<28x256xf32>
    %153 = vector.broadcast %150 : vector<28x1xf32> to vector<28x256xf32>
    %154 = arith.mulf %153, %152 : vector<28x256xf32>
    %155 = vector.extract_strided_slice %149 {offsets = [0, 1], sizes = [28, 1], strides = [1, 1]} : vector<28x2xf32> to vector<28x1xf32>
    %c1_65 = arith.constant 1 : index
    %c0_66 = arith.constant 0 : index
    %c0_67 = arith.constant 0 : index
    %156 = vector.load %arg10[%c1_65, %c0_66, %c0_67] : memref<2x28x256xf32, #tpu.memory_space<vmem>>, vector<1x28x256xf32>
    %157 = vector.shape_cast %156 : vector<1x28x256xf32> to vector<28x256xf32>
    %158 = vector.broadcast %155 : vector<28x1xf32> to vector<28x256xf32>
    %159 = arith.mulf %158, %157 : vector<28x256xf32>
    %160 = arith.addf %154, %159 : vector<28x256xf32>
    %c0_68 = arith.constant 0 : index
    %c0_69 = arith.constant 0 : index
    %161 = vector.load %arg11[%c0_68, %c0_69] : memref<2x28xf32, #tpu.memory_space<vmem>>, vector<2x28xf32>
    %cst_70 = arith.constant dense<0.000000e+00> : vector<2x256xf32>
    %162 = tpu.matmul %161, %160, %cst_70 {dimension_numbers = #tpu.dot_dimension_numbers<[1], [0], [0], [1], [0, 0, 1, 1], [], []>} : vector<2x28xf32>, vector<28x256xf32>, vector<2x256xf32> -> vector<2x256xf32>
    %c0_71 = arith.constant 0 : index
    %c0_72 = arith.constant 0 : index
    %163 = vector.load %arg12[%c0_71, %c0_72] : memref<1x256xf32, #tpu.memory_space<vmem>>, vector<1x256xf32>
    %164 = vector.broadcast %163 : vector<1x256xf32> to vector<2x256xf32>
    %165 = arith.addf %162, %164 : vector<2x256xf32>
    %cst_73 = arith.constant 0.000000e+00 : f32
    %166 = vector.broadcast %cst_73 : f32 to vector<2x256xf32>
    %167 = arith.maximumf %165, %166 : vector<2x256xf32>
    %c0_74 = arith.constant 0 : index
    %c0_75 = arith.constant 0 : index
    %168 = vector.load %arg13[%c0_74, %c0_75] : memref<256x2xf32, #tpu.memory_space<vmem>>, vector<256x2xf32>
    %cst_76 = arith.constant dense<0.000000e+00> : vector<2x2xf32>
    %169 = tpu.matmul %167, %168, %cst_76 {dimension_numbers = #tpu.dot_dimension_numbers<[1], [0], [0], [1], [0, 0, 1, 1], [], []>} : vector<2x256xf32>, vector<256x2xf32>, vector<2x2xf32> -> vector<2x2xf32>
    %c0_77 = arith.constant 0 : index
    %c0_78 = arith.constant 0 : index
    %170 = vector.load %arg14[%c0_77, %c0_78] : memref<1x2xf32, #tpu.memory_space<vmem>>, vector<1x2xf32>
    %171 = vector.broadcast %170 : vector<1x2xf32> to vector<2x2xf32>
    %172 = arith.addf %169, %171 : vector<2x2xf32>
    %cst_79 = arith.constant dense<0xFF800000> : vector<2xf32>
    %173 = vector.multi_reduction <maximumf>, %172, %cst_79 [1] : vector<2x2xf32> to vector<2xf32>
    %174 = vector.shape_cast %173 : vector<2xf32> to vector<2x1xf32>
    %175 = vector.broadcast %174 : vector<2x1xf32> to vector<2x2xf32>
    %176 = arith.subf %172, %175 : vector<2x2xf32>
    %177 = math.exp %176 : vector<2x2xf32>
    %cst_80 = arith.constant dense<0.000000e+00> : vector<2xf32>
    %178 = vector.multi_reduction <add>, %177, %cst_80 [1] : vector<2x2xf32> to vector<2xf32>
    %179 = vector.shape_cast %178 : vector<2xf32> to vector<2x1xf32>
    %180 = vector.broadcast %179 : vector<2x1xf32> to vector<2x2xf32>
    %181 = arith.divf %177, %180 : vector<2x2xf32>
    %c0_81 = arith.constant 0 : index
    %c0_82 = arith.constant 0 : index
    %182 = vector.load %arg15[%c0_81, %c0_82] : memref<2x2xf32, #tpu.memory_space<vmem>>, vector<2x2xf32>
    tpu.vector_store %arg15[%c0_81, %c0_82], %181 {strides = array<i32>} : memref<2x2xf32, #tpu.memory_space<vmem>>, vector<2x2xf32>,
    return
  }
}

</mosaic_0001>

<llo_original>
// kernel: tile.18
$region0: #{tile.18}
  #allocation0 [shape = 's32[1]{0}', space=sflag, size = 0x4, scoped, tag = 'scoped memory for tile.18']
  %s0 = inlined_call_operand.vmem [shape: f32[128], index: 0, kind: input, shape index: {}]
  %s1 = inlined_call_operand.vmem [shape: f32[4,128], index: 1, kind: output, shape index: {}]
  // Predicated region
  $region2: #{tile.18} parent=0 // pred_check
    _
  $region3: #{tile.18} parent=0 // pred_check_branch
    %3 = sbr.rel (0) target = $region5
  $region4: #{tile.18} parent=0 // pred_region
    _
  $region5: #{tile.18} parent=0 // pred_fallthru
    _
  %v4 = vld [vmem:[%s0] ss:$0 sm:$0xff]
  %5 = vst [vmem:[%s1] sm:$0xf] %v4

// kernel: pure_cnn_forward.1
$region0: #{pure_cnn_forward.1}
  #allocation0 [shape = 'u32[]', space=smem, size = 0x4, offset = 0x4, fixed_abs, tag = 'smem constant byte address 0x4 - core index']
  #allocation1 [shape = 'u32[72,128]{1,0:T(1,128)}', space=vmem, size = 0x9000, scoped, tag = 'internal scratch']
  %s0 = inlined_call_operand.vmem [shape: f32[28,48], index: 0, kind: input, shape index: {}]
  %s1 = inlined_call_operand.vmem [shape: f32[48,512], index: 1, kind: input, shape index: {}]
  %s2 = inlined_call_operand.vmem [shape: f32[1,512], index: 2, kind: input, shape index: {}]
  %s3 = inlined_call_operand.vmem [shape: f32[512,128], index: 3, kind: input, shape index: {}]
  %s4 = inlined_call_operand.vmem [shape: f32[1,128], index: 4, kind: input, shape index: {}]
  %s5 = inlined_call_operand.vmem [shape: f32[12,128], index: 5, kind: input, shape index: {}]
  %s6 = inlined_call_operand.vmem [shape: f32[6,384,128], index: 6, kind: input, shape index: {}]
  %s7 = inlined_call_operand.vmem [shape: f32[384,2], index: 7, kind: input, shape index: {}]
  %s8 = inlined_call_operand.vmem [shape: f32[1,2], index: 8, kind: input, shape index: {}]
  %s9 = inlined_call_operand.vmem [shape: f32[28,2], index: 9, kind: input, shape index: {}]
  %s10 = inlined_call_operand.vmem [shape: f32[2,28,256], index: 10, kind: input, shape index: {}]
  %s11 = inlined_call_operand.vmem [shape: f32[2,28], index: 11, kind: input, shape index: {}]
  %s12 = inlined_call_operand.vmem [shape: f32[1,256], index: 12, kind: input, shape index: {}]
  %s13 = inlined_call_operand.vmem [shape: f32[256,2], index: 13, kind: input, shape index: {}]
  %s14 = inlined_call_operand.vmem [shape: f32[1,2], index: 14, kind: input, shape index: {}]
  %s15 = inlined_call_operand.hbm [shape: f32[2,2], index: 15, kind: output, shape index: {}]
  %s16 = sld [smem:[#allocation0]]
  $region70: #{pure_cnn_forward.1} parent=0
    _
  %s18 = ssub.s32 1, %s16
  %s19 = scalar_select 0, %s18, %s16
  $region1: #{pure_cnn_forward.1} parent=0
    #allocation2 [shape = 'u8[1024]{0}', space=vmem, size = 0x400, scoped, tag = 'output window, operand 0, single buffered']
    #allocation3 [shape = 's32[1]{0}', space=sflag, size = 0x4, scoped, tag = 'scoped memory for pure_cnn_forward.1']
    %20 = vsyncpa [#allocation3], 0
    // Predicated region
    $region2: #{pure_cnn_forward.1} parent=1 // pred_check
      _
    $region3: #{pure_cnn_forward.1} parent=1 // pred_check_branch
      %22 = sbr.rel (0) target = $region5
    $region4: #{pure_cnn_forward.1} parent=1 // pred_region
      _
    $region5: #{pure_cnn_forward.1} parent=1 // pred_fallthru
      _
    // Predicated region
    $region6: #{pure_cnn_forward.1} parent=1 // pred_check
      _
    $region7: #{pure_cnn_forward.1} parent=1 // pred_check_branch
      %24 = sbr.rel (0) target = $region9
    $region8: #{pure_cnn_forward.1} parent=1 // pred_region
      _
    $region9: #{pure_cnn_forward.1} parent=1 // pred_fallthru
      _
    // Predicated region
    $region10: #{pure_cnn_forward.1} parent=1 // pred_check
      _
    $region11: #{pure_cnn_forward.1} parent=1 // pred_check_branch
      %26 = sbr.rel (0) target = $region13
    $region12: #{pure_cnn_forward.1} parent=1 // pred_region
      _
    $region13: #{pure_cnn_forward.1} parent=1 // pred_fallthru
      _
    // Predicated region
    $region14: #{pure_cnn_forward.1} parent=1 // pred_check
      _
    $region15: #{pure_cnn_forward.1} parent=1 // pred_check_branch
      %28 = sbr.rel (0) target = $region17
    $region16: #{pure_cnn_forward.1} parent=1 // pred_region
      _
    $region17: #{pure_cnn_forward.1} parent=1 // pred_fallthru
      _
    // Predicated region
    $region18: #{pure_cnn_forward.1} parent=1 // pred_check
      _
    $region19: #{pure_cnn_forward.1} parent=1 // pred_check_branch
      %30 = sbr.rel (0) target = $region21
    $region20: #{pure_cnn_forward.1} parent=1 // pred_region
      _
    $region21: #{pure_cnn_forward.1} parent=1 // pred_fallthru
      _
    // Predicated region
    $region22: #{pure_cnn_forward.1} parent=1 // pred_check
      _
    $region23: #{pure_cnn_forward.1} parent=1 // pred_check_branch
      %32 = sbr.rel (0) target = $region25
    $region24: #{pure_cnn_forward.1} parent=1 // pred_region
      _
    $region25: #{pure_cnn_forward.1} parent=1 // pred_fallthru
      _
    // Predicated region
    $region26: #{pure_cnn_forward.1} parent=1 // pred_check
      _
    $region27: #{pure_cnn_forward.1} parent=1 // pred_check_branch
      %34 = sbr.rel (0) target = $region29
    $region28: #{pure_cnn_forward.1} parent=1 // pred_region
      _
    $region29: #{pure_cnn_forward.1} parent=1 // pred_fallthru
      _
    // Predicated region
    $region30: #{pure_cnn_forward.1} parent=1 // pred_check
      _
    $region31: #{pure_cnn_forward.1} parent=1 // pred_check_branch
      %36 = sbr.rel (0) target = $region33
    $region32: #{pure_cnn_forward.1} parent=1 // pred_region
      _
    $region33: #{pure_cnn_forward.1} parent=1 // pred_fallthru
      _
    // Predicated region
    $region34: #{pure_cnn_forward.1} parent=1 // pred_check
      _
    $region35: #{pure_cnn_forward.1} parent=1 // pred_check_branch
      %38 = sbr.rel (0) target = $region37
    $region36: #{pure_cnn_forward.1} parent=1 // pred_region
      _
    $region37: #{pure_cnn_forward.1} parent=1 // pred_fallthru
      _
    // Predicated region
    $region38: #{pure_cnn_forward.1} parent=1 // pred_check
      _
    $region39: #{pure_cnn_forward.1} parent=1 // pred_check_branch
      %40 = sbr.rel (0) target = $region41
    $region40: #{pure_cnn_forward.1} parent=1 // pred_region
      _
    $region41: #{pure_cnn_forward.1} parent=1 // pred_fallthru
      _
    // Predicated region
    $region42: #{pure_cnn_forward.1} parent=1 // pred_check
      _
    $region43: #{pure_cnn_forward.1} parent=1 // pred_check_branch
      %42 = sbr.rel (0) target = $region45
    $region44: #{pure_cnn_forward.1} parent=1 // pred_region
      _
    $region45: #{pure_cnn_forward.1} parent=1 // pred_fallthru
      _
    // Predicated region
    $region46: #{pure_cnn_forward.1} parent=1 // pred_check
      _
    $region47: #{pure_cnn_forward.1} parent=1 // pred_check_branch
      %44 = sbr.rel (0) target = $region49
    $region48: #{pure_cnn_forward.1} parent=1 // pred_region
      _
    $region49: #{pure_cnn_forward.1} parent=1 // pred_fallthru
      _
    // Predicated region
    $region50: #{pure_cnn_forward.1} parent=1 // pred_check
      _
    $region51: #{pure_cnn_forward.1} parent=1 // pred_check_branch
      %46 = sbr.rel (0) target = $region53
    $region52: #{pure_cnn_forward.1} parent=1 // pred_region
      _
    $region53: #{pure_cnn_forward.1} parent=1 // pred_fallthru
      _
    // Predicated region
    $region54: #{pure_cnn_forward.1} parent=1 // pred_check
      _
    $region55: #{pure_cnn_forward.1} parent=1 // pred_check_branch
      %48 = sbr.rel (0) target = $region57
    $region56: #{pure_cnn_forward.1} parent=1 // pred_region
      _
    $region57: #{pure_cnn_forward.1} parent=1 // pred_fallthru
      _
    // Predicated region
    $region58: #{pure_cnn_forward.1} parent=1 // pred_check
      _
    $region59: #{pure_cnn_forward.1} parent=1 // pred_check_branch
      %50 = sbr.rel (0) target = $region61
    $region60: #{pure_cnn_forward.1} parent=1 // pred_region
      _
    $region61: #{pure_cnn_forward.1} parent=1 // pred_fallthru
      _
    %v51 = vld [vmem:[%s0] sm:$0xff]
    %v52 = vld [vmem:[%s0 + $0x8] sm:$0xff]
    %v53 = vld [vmem:[%s0 + $0x10] sm:$0xff]
    %v54 = vld [vmem:[%s0 + $0x18] sm:$0xf]
    %v55 = vld [vmem:[%s1] sm:$0xff]
    %v56 = vld [vmem:[%s1 + $0x8] sm:$0xff]
    %v57 = vld [vmem:[%s1 + $0x10] sm:$0xff]
    %v58 = vld [vmem:[%s1 + $0x18] sm:$0xff]
    %v59 = vld [vmem:[%s1 + $0x20] sm:$0xff]
    %v60 = vld [vmem:[%s1 + $0x28] sm:$0xff]
    %v61 = vld [vmem:[%s1 + $0x30] sm:$0xff]
    %v62 = vld [vmem:[%s1 + $0x38] sm:$0xff]
    %v63 = vld [vmem:[%s1 + $0x40] sm:$0xff]
    %v64 = vld [vmem:[%s1 + $0x48] sm:$0xff]
    %v65 = vld [vmem:[%s1 + $0x50] sm:$0xff]
    %v66 = vld [vmem:[%s1 + $0x58] sm:$0xff]
    %v67 = vld [vmem:[%s1 + $0x60] sm:$0xff]
    %v68 = vld [vmem:[%s1 + $0x68] sm:$0xff]
    %v69 = vld [vmem:[%s1 + $0x70] sm:$0xff]
    %v70 = vld [vmem:[%s1 + $0x78] sm:$0xff]
    %v71 = vld [vmem:[%s1 + $0x80] sm:$0xff]
    %v72 = vld [vmem:[%s1 + $0x88] sm:$0xff]
    %v73 = vld [vmem:[%s1 + $0x90] sm:$0xff]
    %v74 = vld [vmem:[%s1 + $0x98] sm:$0xff]
    %v75 = vld [vmem:[%s1 + $0xa0] sm:$0xff]
    %v76 = vld [vmem:[%s1 + $0xa8] sm:$0xff]
    %v77 = vld [vmem:[%s1 + $0xb0] sm:$0xff]
    %v78 = vld [vmem:[%s1 + $0xb8] sm:$0xff]
    %v79 = vld [vmem:[%s2] sm:$0xf]
    %v81 = vperm.slane %v79, 0
    %v82 = vperm.slane %v79, 1
    %v83 = vperm.slane %v79, 2
    %v84 = vperm.slane %v79, 3
    %vm89 = vcmask 392192
    %v91 = vsel %vm89, %v51, 0
    %v94 = vsel %vm89, %v52, 0
    %v97 = vsel %vm89, %v53, 0
    %v100 = vsel %vm89, %v54, 0
    %102 = vmatpush.msra.mxu0 0.0
    %103 = vmatpush.msra.mxu0 0.0
    %104 = vmatpush.msra.mxu0 0.0
    %105 = vmatpush.msra.mxu0 0.0
    %106 = vmatpush.msra.mxu0 0.0
    %107 = vmatpush.msra.mxu0 0.0
    %108 = vmatpush.msra.mxu0 0.0
    %109 = vmatpush.msra.mxu0 0.0
    %110 = vmatpush.msra.mxu0 0.0
    %111 = vmatpush.msra.mxu0 0.0
    %112 = vmatpush.msra.mxu0 %v75
    %113 = vmatpush.msra.mxu0 %v71
    %114 = vmatpush.msra.mxu0 %v67
    %115 = vmatpush.msra.mxu0 %v63
    %116 = vmatpush.msra.mxu0 %v59
    %117 = vmatpush.msra.mxu0 %v55
    %118 = vmatmul.f32.gmra.mxu0 %v91
    %v119 = vpop.f32.mrf.mxu0
    %v120 = vadd.f32 %v81, %v119
    %121 = vmatmul.f32.gmra.mxu0 %v94
    %v122 = vpop.f32.mrf.mxu0
    %v123 = vadd.f32 %v81, %v122
    %124 = vmatmul.f32.gmra.mxu0 %v97
    %v125 = vpop.f32.mrf.mxu0
    %v126 = vadd.f32 %v81, %v125
    %127 = vmatmul.f32.gmra.mxu0 %v100
    %v128 = vpop.f32.mrf.mxu0
    %v129 = vadd.f32 %v81, %v128
    %130 = vdwg.mxu0
    %131 = vmatpush.msra.mxu0 0.0
    %132 = vmatpush.msra.mxu0 0.0
    %133 = vmatpush.msra.mxu0 0.0
    %134 = vmatpush.msra.mxu0 0.0
    %135 = vmatpush.msra.mxu0 0.0
    %136 = vmatpush.msra.mxu0 0.0
    %137 = vmatpush.msra.mxu0 0.0
    %138 = vmatpush.msra.mxu0 0.0
    %139 = vmatpush.msra.mxu0 0.0
    %140 = vmatpush.msra.mxu0 0.0
    %141 = vmatpush.msra.mxu0 %v76
    %142 = vmatpush.msra.mxu0 %v72
    %143 = vmatpush.msra.mxu0 %v68
    %144 = vmatpush.msra.mxu0 %v64
    %145 = vmatpush.msra.mxu0 %v60
    %146 = vmatpush.msra.mxu0 %v56
    %147 = vmatmul.f32.gmra.mxu0 %v91
    %v148 = vpop.f32.mrf.mxu0
    %v149 = vadd.f32 %v82, %v148
    %150 = vmatmul.f32.gmra.mxu0 %v94
    %v151 = vpop.f32.mrf.mxu0
    %v152 = vadd.f32 %v82, %v151
    %153 = vmatmul.f32.gmra.mxu0 %v97
    %v154 = vpop.f32.mrf.mxu0
    %v155 = vadd.f32 %v82, %v154
    %156 = vmatmul.f32.gmra.mxu0 %v100
    %v157 = vpop.f32.mrf.mxu0
    %v158 = vadd.f32 %v82, %v157
    %159 = vdwg.mxu0
    %160 = vmatpush.msra.mxu0 0.0
    %161 = vmatpush.msra.mxu0 0.0
    %162 = vmatpush.msra.mxu0 0.0
    %163 = vmatpush.msra.mxu0 0.0
    %164 = vmatpush.msra.mxu0 0.0
    %165 = vmatpush.msra.mxu0 0.0
    %166 = vmatpush.msra.mxu0 0.0
    %167 = vmatpush.msra.mxu0 0.0
    %168 = vmatpush.msra.mxu0 0.0
    %169 = vmatpush.msra.mxu0 0.0
    %170 = vmatpush.msra.mxu0 %v77
    %171 = vmatpush.msra.mxu0 %v73
    %172 = vmatpush.msra.mxu0 %v69
    %173 = vmatpush.msra.mxu0 %v65
    %174 = vmatpush.msra.mxu0 %v61
    %175 = vmatpush.msra.mxu0 %v57
    %176 = vmatmul.f32.gmra.mxu0 %v91
    %v177 = vpop.f32.mrf.mxu0
    %v178 = vadd.f32 %v83, %v177
    %179 = vmatmul.f32.gmra.mxu0 %v94
    %v180 = vpop.f32.mrf.mxu0
    %v181 = vadd.f32 %v83, %v180
    %182 = vmatmul.f32.gmra.mxu0 %v97
    %v183 = vpop.f32.mrf.mxu0
    %v184 = vadd.f32 %v83, %v183
    %185 = vmatmul.f32.gmra.mxu0 %v100
    %v186 = vpop.f32.mrf.mxu0
    %v187 = vadd.f32 %v83, %v186
    %188 = vdwg.mxu0
    %189 = vmatpush.msra.mxu0 0.0
    %190 = vmatpush.msra.mxu0 0.0
    %191 = vmatpush.msra.mxu0 0.0
    %192 = vmatpush.msra.mxu0 0.0
    %193 = vmatpush.msra.mxu0 0.0
    %194 = vmatpush.msra.mxu0 0.0
    %195 = vmatpush.msra.mxu0 0.0
    %196 = vmatpush.msra.mxu0 0.0
    %197 = vmatpush.msra.mxu0 0.0
    %198 = vmatpush.msra.mxu0 0.0
    %199 = vmatpush.msra.mxu0 %v78
    %200 = vmatpush.msra.mxu0 %v74
    %201 = vmatpush.msra.mxu0 %v70
    %202 = vmatpush.msra.mxu0 %v66
    %203 = vmatpush.msra.mxu0 %v62
    %204 = vmatpush.msra.mxu0 %v58
    %205 = vmatmul.f32.gmra.mxu0 %v91
    %v206 = vpop.f32.mrf.mxu0
    %v207 = vadd.f32 %v84, %v206
    %208 = vmatmul.f32.gmra.mxu0 %v94
    %v209 = vpop.f32.mrf.mxu0
    %v210 = vadd.f32 %v84, %v209
    %211 = vmatmul.f32.gmra.mxu0 %v97
    %v212 = vpop.f32.mrf.mxu0
    %v213 = vadd.f32 %v84, %v212
    %214 = vmatmul.f32.gmra.mxu0 %v100
    %v215 = vpop.f32.mrf.mxu0
    %v216 = vadd.f32 %v84, %v215
    %217 = vdwg.mxu0
    %v218 = vmax.f32 %v120, 0.0
    %v219 = vmax.f32 %v149, 0.0
    %v220 = vmax.f32 %v178, 0.0
    %v221 = vmax.f32 %v207, 0.0
    %v222 = vmax.f32 %v123, 0.0
    %v223 = vmax.f32 %v152, 0.0
    %v224 = vmax.f32 %v181, 0.0
    %v225 = vmax.f32 %v210, 0.0
    %v226 = vmax.f32 %v126, 0.0
    %v227 = vmax.f32 %v155, 0.0
    %v228 = vmax.f32 %v184, 0.0
    %v229 = vmax.f32 %v213, 0.0
    %v230 = vmax.f32 %v129, 0.0
    %v231 = vmax.f32 %v158, 0.0
    %v232 = vmax.f32 %v187, 0.0
    %v233 = vmax.f32 %v216, 0.0
    %v234 = vld [vmem:[%s3] sm:$0xff]
    %v235 = vld [vmem:[%s3 + $0x8] sm:$0xff]
    %v236 = vld [vmem:[%s3 + $0x10] sm:$0xff]
    %v237 = vld [vmem:[%s3 + $0x18] sm:$0xff]
    %v238 = vld [vmem:[%s3 + $0x20] sm:$0xff]
    %v239 = vld [vmem:[%s3 + $0x28] sm:$0xff]
    %v240 = vld [vmem:[%s3 + $0x30] sm:$0xff]
    %v241 = vld [vmem:[%s3 + $0x38] sm:$0xff]
    %v242 = vld [vmem:[%s3 + $0x40] sm:$0xff]
    %v243 = vld [vmem:[%s3 + $0x48] sm:$0xff]
    %v244 = vld [vmem:[%s3 + $0x50] sm:$0xff]
    %v245 = vld [vmem:[%s3 + $0x58] sm:$0xff]
    %v246 = vld [vmem:[%s3 + $0x60] sm:$0xff]
    %v247 = vld [vmem:[%s3 + $0x68] sm:$0xff]
    %v248 = vld [vmem:[%s3 + $0x70] sm:$0xff]
    %v249 = vld [vmem:[%s3 + $0x78] sm:$0xff]
    %v250 = vld [vmem:[%s3 + $0x80] sm:$0xff]
    %v251 = vld [vmem:[%s3 + $0x88] sm:$0xff]
    %v252 = vld [vmem:[%s3 + $0x90] sm:$0xff]
    %v253 = vld [vmem:[%s3 + $0x98] sm:$0xff]
    %v254 = vld [vmem:[%s3 + $0xa0] sm:$0xff]
    %v255 = vld [vmem:[%s3 + $0xa8] sm:$0xff]
    %v256 = vld [vmem:[%s3 + $0xb0] sm:$0xff]
    %v257 = vld [vmem:[%s3 + $0xb8] sm:$0xff]
    %v258 = vld [vmem:[%s3 + $0xc0] sm:$0xff]
    %v259 = vld [vmem:[%s3 + $0xc8] sm:$0xff]
    %v260 = vld [vmem:[%s3 + $0xd0] sm:$0xff]
    %v261 = vld [vmem:[%s3 + $0xd8] sm:$0xff]
    %v262 = vld [vmem:[%s3 + $0xe0] sm:$0xff]
    %v263 = vld [vmem:[%s3 + $0xe8] sm:$0xff]
    %v264 = vld [vmem:[%s3 + $0xf0] sm:$0xff]
    %v265 = vld [vmem:[%s3 + $0xf8] sm:$0xff]
    %v266 = vld [vmem:[%s3 + $0x100] sm:$0xff]
    %v267 = vld [vmem:[%s3 + $0x108] sm:$0xff]
    %v268 = vld [vmem:[%s3 + $0x110] sm:$0xff]
    %v269 = vld [vmem:[%s3 + $0x118] sm:$0xff]
    %v270 = vld [vmem:[%s3 + $0x120] sm:$0xff]
    %v271 = vld [vmem:[%s3 + $0x128] sm:$0xff]
    %v272 = vld [vmem:[%s3 + $0x130] sm:$0xff]
    %v273 = vld [vmem:[%s3 + $0x138] sm:$0xff]
    %v274 = vld [vmem:[%s3 + $0x140] sm:$0xff]
    %v275 = vld [vmem:[%s3 + $0x148] sm:$0xff]
    %v276 = vld [vmem:[%s3 + $0x150] sm:$0xff]
    %v277 = vld [vmem:[%s3 + $0x158] sm:$0xff]
    %v278 = vld [vmem:[%s3 + $0x160] sm:$0xff]
    %v279 = vld [vmem:[%s3 + $0x168] sm:$0xff]
    %v280 = vld [vmem:[%s3 + $0x170] sm:$0xff]
    %v281 = vld [vmem:[%s3 + $0x178] sm:$0xff]
    %v282 = vld [vmem:[%s3 + $0x180] sm:$0xff]
    %v283 = vld [vmem:[%s3 + $0x188] sm:$0xff]
    %v284 = vld [vmem:[%s3 + $0x190] sm:$0xff]
    %v285 = vld [vmem:[%s3 + $0x198] sm:$0xff]
    %v286 = vld [vmem:[%s3 + $0x1a0] sm:$0xff]
    %v287 = vld [vmem:[%s3 + $0x1a8] sm:$0xff]
    %v288 = vld [vmem:[%s3 + $0x1b0] sm:$0xff]
    %v289 = vld [vmem:[%s3 + $0x1b8] sm:$0xff]
    %v290 = vld [vmem:[%s3 + $0x1c0] sm:$0xff]
    %v291 = vld [vmem:[%s3 + $0x1c8] sm:$0xff]
    %v292 = vld [vmem:[%s3 + $0x1d0] sm:$0xff]
    %v293 = vld [vmem:[%s3 + $0x1d8] sm:$0xff]
    %v294 = vld [vmem:[%s3 + $0x1e0] sm:$0xff]
    %v295 = vld [vmem:[%s3 + $0x1e8] sm:$0xff]
    %v296 = vld [vmem:[%s3 + $0x1f0] sm:$0xff]
    %v297 = vld [vmem:[%s3 + $0x1f8] sm:$0xff]
    %v298 = vld [vmem:[%s4] sm:$0x1]
    %v300 = vperm.slane %v298, 0
    %302 = vmatpush.msra.mxu0 %v249
    %303 = vmatpush.msra.mxu0 %v248
    %304 = vmatpush.msra.mxu0 %v247
    %305 = vmatpush.msra.mxu0 %v246
    %306 = vmatpush.msra.mxu0 %v245
    %307 = vmatpush.msra.mxu0 %v244
    %308 = vmatpush.msra.mxu0 %v243
    %309 = vmatpush.msra.mxu0 %v242
    %310 = vmatpush.msra.mxu0 %v241
    %311 = vmatpush.msra.mxu0 %v240
    %312 = vmatpush.msra.mxu0 %v239
    %313 = vmatpush.msra.mxu0 %v238
    %314 = vmatpush.msra.mxu0 %v237
    %315 = vmatpush.msra.mxu0 %v236
    %316 = vmatpush.msra.mxu0 %v235
    %317 = vmatpush.msra.mxu0 %v234
    %318 = vmatmul.f32.gmra.mxu0 %v218
    %v319 = vpop.f32.mrf.mxu0
    %v320 = vadd.f32 %v300, %v319
    %321 = vmatmul.f32.gmra.mxu0 %v222
    %v322 = vpop.f32.mrf.mxu0
    %v323 = vadd.f32 %v300, %v322
    %324 = vmatmul.f32.gmra.mxu0 %v226
    %v325 = vpop.f32.mrf.mxu0
    %v326 = vadd.f32 %v300, %v325
    %327 = vmatmul.f32.gmra.mxu0 %v230
    %v328 = vpop.f32.mrf.mxu0
    %v329 = vadd.f32 %v300, %v328
    %330 = vdwg.mxu0
    %331 = vmatpush.msra.mxu0 %v265
    %332 = vmatpush.msra.mxu0 %v264
    %333 = vmatpush.msra.mxu0 %v263
    %334 = vmatpush.msra.mxu0 %v262
    %335 = vmatpush.msra.mxu0 %v261
    %336 = vmatpush.msra.mxu0 %v260
    %337 = vmatpush.msra.mxu0 %v259
    %338 = vmatpush.msra.mxu0 %v258
    %339 = vmatpush.msra.mxu0 %v257
    %340 = vmatpush.msra.mxu0 %v256
    %341 = vmatpush.msra.mxu0 %v255
    %342 = vmatpush.msra.mxu0 %v254
    %343 = vmatpush.msra.mxu0 %v253
    %344 = vmatpush.msra.mxu0 %v252
    %345 = vmatpush.msra.mxu0 %v251
    %346 = vmatpush.msra.mxu0 %v250
    %347 = vmatmul.f32.gmra.mxu0 %v219
    %v348 = vpop.f32.mrf.mxu0
    %v349 = vadd.f32 %v320, %v348
    %350 = vmatmul.f32.gmra.mxu0 %v223
    %v351 = vpop.f32.mrf.mxu0
    %v352 = vadd.f32 %v323, %v351
    %353 = vmatmul.f32.gmra.mxu0 %v227
    %v354 = vpop.f32.mrf.mxu0
    %v355 = vadd.f32 %v326, %v354
    %356 = vmatmul.f32.gmra.mxu0 %v231
    %v357 = vpop.f32.mrf.mxu0
    %v358 = vadd.f32 %v329, %v357
    %359 = vdwg.mxu0
    %360 = vmatpush.msra.mxu0 %v281
    %361 = vmatpush.msra.mxu0 %v280
    %362 = vmatpush.msra.mxu0 %v279
    %363 = vmatpush.msra.mxu0 %v278
    %364 = vmatpush.msra.mxu0 %v277
    %365 = vmatpush.msra.mxu0 %v276
    %366 = vmatpush.msra.mxu0 %v275
    %367 = vmatpush.msra.mxu0 %v274
    %368 = vmatpush.msra.mxu0 %v273
    %369 = vmatpush.msra.mxu0 %v272
    %370 = vmatpush.msra.mxu0 %v271
    %371 = vmatpush.msra.mxu0 %v270
    %372 = vmatpush.msra.mxu0 %v269
    %373 = vmatpush.msra.mxu0 %v268
    %374 = vmatpush.msra.mxu0 %v267
    %375 = vmatpush.msra.mxu0 %v266
    %376 = vmatmul.f32.gmra.mxu0 %v220
    %v377 = vpop.f32.mrf.mxu0
    %v378 = vadd.f32 %v349, %v377
    %379 = vmatmul.f32.gmra.mxu0 %v224
    %v380 = vpop.f32.mrf.mxu0
    %v381 = vadd.f32 %v352, %v380
    %382 = vmatmul.f32.gmra.mxu0 %v228
    %v383 = vpop.f32.mrf.mxu0
    %v384 = vadd.f32 %v355, %v383
    %385 = vmatmul.f32.gmra.mxu0 %v232
    %v386 = vpop.f32.mrf.mxu0
    %v387 = vadd.f32 %v358, %v386
    %388 = vdwg.mxu0
    %389 = vmatpush.msra.mxu0 %v297
    %390 = vmatpush.msra.mxu0 %v296
    %391 = vmatpush.msra.mxu0 %v295
    %392 = vmatpush.msra.mxu0 %v294
    %393 = vmatpush.msra.mxu0 %v293
    %394 = vmatpush.msra.mxu0 %v292
    %395 = vmatpush.msra.mxu0 %v291
    %396 = vmatpush.msra.mxu0 %v290
    %397 = vmatpush.msra.mxu0 %v289
    %398 = vmatpush.msra.mxu0 %v288
    %399 = vmatpush.msra.mxu0 %v287
    %400 = vmatpush.msra.mxu0 %v286
    %401 = vmatpush.msra.mxu0 %v285
    %402 = vmatpush.msra.mxu0 %v284
    %403 = vmatpush.msra.mxu0 %v283
    %404 = vmatpush.msra.mxu0 %v282
    %405 = vmatmul.f32.gmra.mxu0 %v221
    %v406 = vpop.f32.mrf.mxu0
    %v407 = vadd.f32 %v378, %v406
    %408 = vmatmul.f32.gmra.mxu0 %v225
    %v409 = vpop.f32.mrf.mxu0
    %v410 = vadd.f32 %v381, %v409
    %411 = vmatmul.f32.gmra.mxu0 %v229
    %v412 = vpop.f32.mrf.mxu0
    %v413 = vadd.f32 %v384, %v412
    %414 = vmatmul.f32.gmra.mxu0 %v233
    %v415 = vpop.f32.mrf.mxu0
    %v416 = vadd.f32 %v387, %v415
    %417 = vdwg.mxu0
    %v418 = vld [vmem:[%s9] sm:$0xff]
    %v419 = vld [vmem:[%s9 + $0x8] sm:$0xff]
    %v420 = vld [vmem:[%s9 + $0x10] sm:$0xff]
    %v421 = vld [vmem:[%s9 + $0x18] sm:$0xf]
    %v422 = vld [vmem:[%s5] sm:$0x1]
    %v423 = vld [vmem:[%s5 + $0x1] sm:$0x1]
    %v424 = vld [vmem:[%s5 + $0x2] sm:$0x1]
    %v425 = vld [vmem:[%s5 + $0x3] sm:$0x1]
    %v426 = vperm.slane %v422, 0
    %v427 = vmul.f32 %v407, %v426
    %v428 = vmul.f32 %v410, %v426
    %v429 = vmul.f32 %v413, %v426
    %v430 = vmul.f32 %v416, %v426
    %v431 = vperm.slane %v423, 0
    %v432 = vadd.f32 %v427, %v431
    %v433 = vadd.f32 %v428, %v431
    %v434 = vadd.f32 %v429, %v431
    %v435 = vadd.f32 %v430, %v431
    %v436 = vmax.f32 %v432, 0.0
    %v437 = vmax.f32 %v433, 0.0
    %v438 = vmax.f32 %v434, 0.0
    %v439 = vmax.f32 %v435, 0.0
    %v440 = vld [vmem:[%s6] sm:$0xff]
    %v441 = vld [vmem:[%s6 + $0x8] sm:$0xff]
    %v442 = vld [vmem:[%s6 + $0x10] sm:$0xff]
    %v443 = vld [vmem:[%s6 + $0x18] sm:$0xff]
    %v444 = vld [vmem:[%s6 + $0x20] sm:$0xff]
    %v445 = vld [vmem:[%s6 + $0x28] sm:$0xff]
    %v446 = vld [vmem:[%s6 + $0x30] sm:$0xff]
    %v447 = vld [vmem:[%s6 + $0x38] sm:$0xff]
    %v448 = vld [vmem:[%s6 + $0x40] sm:$0xff]
    %v449 = vld [vmem:[%s6 + $0x48] sm:$0xff]
    %v450 = vld [vmem:[%s6 + $0x50] sm:$0xff]
    %v451 = vld [vmem:[%s6 + $0x58] sm:$0xff]
    %v452 = vld [vmem:[%s6 + $0x60] sm:$0xff]
    %v453 = vld [vmem:[%s6 + $0x68] sm:$0xff]
    %v454 = vld [vmem:[%s6 + $0x70] sm:$0xff]
    %v455 = vld [vmem:[%s6 + $0x78] sm:$0xff]
    %v456 = vld [vmem:[%s6 + $0x80] sm:$0xff]
    %v457 = vld [vmem:[%s6 + $0x88] sm:$0xff]
    %v458 = vld [vmem:[%s6 + $0x90] sm:$0xff]
    %v459 = vld [vmem:[%s6 + $0x98] sm:$0xff]
    %v460 = vld [vmem:[%s6 + $0xa0] sm:$0xff]
    %v461 = vld [vmem:[%s6 + $0xa8] sm:$0xff]
    %v462 = vld [vmem:[%s6 + $0xb0] sm:$0xff]
    %v463 = vld [vmem:[%s6 + $0xb8] sm:$0xff]
    %v464 = vld [vmem:[%s6 + $0xc0] sm:$0xff]
    %v465 = vld [vmem:[%s6 + $0xc8] sm:$0xff]
    %v466 = vld [vmem:[%s6 + $0xd0] sm:$0xff]
    %v467 = vld [vmem:[%s6 + $0xd8] sm:$0xff]
    %v468 = vld [vmem:[%s6 + $0xe0] sm:$0xff]
    %v469 = vld [vmem:[%s6 + $0xe8] sm:$0xff]
    %v470 = vld [vmem:[%s6 + $0xf0] sm:$0xff]
    %v471 = vld [vmem:[%s6 + $0xf8] sm:$0xff]
    %v472 = vld [vmem:[%s6 + $0x100] sm:$0xff]
    %v473 = vld [vmem:[%s6 + $0x108] sm:$0xff]
    %v474 = vld [vmem:[%s6 + $0x110] sm:$0xff]
    %v475 = vld [vmem:[%s6 + $0x118] sm:$0xff]
    %v476 = vld [vmem:[%s6 + $0x120] sm:$0xff]
    %v477 = vld [vmem:[%s6 + $0x128] sm:$0xff]
    %v478 = vld [vmem:[%s6 + $0x130] sm:$0xff]
    %v479 = vld [vmem:[%s6 + $0x138] sm:$0xff]
    %v480 = vld [vmem:[%s6 + $0x140] sm:$0xff]
    %v481 = vld [vmem:[%s6 + $0x148] sm:$0xff]
    %v482 = vld [vmem:[%s6 + $0x150] sm:$0xff]
    %v483 = vld [vmem:[%s6 + $0x158] sm:$0xff]
    %v484 = vld [vmem:[%s6 + $0x160] sm:$0xff]
    %v485 = vld [vmem:[%s6 + $0x168] sm:$0xff]
    %v486 = vld [vmem:[%s6 + $0x170] sm:$0xff]
    %v487 = vld [vmem:[%s6 + $0x178] sm:$0xff]
    %vm492 = vcmask 1040384
    %v493 = vrot.slane %v436, 7
    %v494 = vrot.slane %v437, 7
    %v495 = vsel %vm492, %v493, %v494
    %v496 = vrot.slane %v438, 7
    %v497 = vsel %vm492, %v494, %v496
    %v498 = vrot.slane %v439, 7
    %v499 = vsel %vm492, %v496, %v498
    %v504 = vsel %vm492, 0.0, %v493
    %506 = vset.pattern.permute.xlu0 0
    %507 = vperm.xlu0 %506, %v418
    %v508 = vpop.permute.xlu0 %507
    %511 = vset.pattern.permute.xlu0 0
    %512 = vperm.xlu0 %511, %v419
    %v513 = vpop.permute.xlu0 %512
    %516 = vset.pattern.permute.xlu0 0
    %517 = vperm.xlu0 %516, %v420
    %v518 = vpop.permute.xlu0 %517
    %521 = vset.pattern.permute.xlu0 0
    %522 = vperm.xlu0 %521, %v421
    %v523 = vpop.permute.xlu0 %522
    %v525 = vmul.f32 %v504, %v508
    %v526 = vmul.f32 %v495, %v513
    %v527 = vmul.f32 %v497, %v518
    %v528 = vmul.f32 %v499, %v523
    %vm529 = vcmask 1046528
    %v530 = vrot.slane %v436, 1
    %v531 = vrot.slane %v437, 1
    %v532 = vsel %vm529, %v530, %v531
    %v533 = vrot.slane %v438, 1
    %v534 = vsel %vm529, %v531, %v533
    %v535 = vrot.slane %v439, 1
    %v536 = vsel %vm529, %v533, %v535
    %vm541 = vcmask 1042432
    %v542 = vsel %vm541, %v535, 0.0
    %543 = vset.pattern.permute.xlu0 1
    %544 = vperm.xlu0 %543, %v418
    %v545 = vpop.permute.xlu0 %544
    %547 = vset.pattern.permute.xlu0 1
    %548 = vperm.xlu0 %547, %v419
    %v549 = vpop.permute.xlu0 %548
    %551 = vset.pattern.permute.xlu0 1
    %552 = vperm.xlu0 %551, %v420
    %v553 = vpop.permute.xlu0 %552
    %555 = vset.pattern.permute.xlu0 1
    %556 = vperm.xlu0 %555, %v421
    %v557 = vpop.permute.xlu0 %556
    %v559 = vmul.f32 %v532, %v545
    %v560 = vmul.f32 %v534, %v549
    %v561 = vmul.f32 %v536, %v553
    %v562 = vmul.f32 %v542, %v557
    %563 = vmatpush.msra.mxu0 %v455
    %564 = vmatpush.msra.mxu0 %v454
    %565 = vmatpush.msra.mxu0 %v453
    %566 = vmatpush.msra.mxu0 %v452
    %567 = vmatpush.msra.mxu0 %v451
    %568 = vmatpush.msra.mxu0 %v450
    %569 = vmatpush.msra.mxu0 %v449
    %570 = vmatpush.msra.mxu0 %v448
    %571 = vmatpush.msra.mxu0 %v447
    %572 = vmatpush.msra.mxu0 %v446
    %573 = vmatpush.msra.mxu0 %v445
    %574 = vmatpush.msra.mxu0 %v444
    %575 = vmatpush.msra.mxu0 %v443
    %576 = vmatpush.msra.mxu0 %v442
    %577 = vmatpush.msra.mxu0 %v441
    %578 = vmatpush.msra.mxu0 %v440
    %579 = vmatmul.f32.gmra.mxu0 %v525
    %v580 = vpop.f32.mrf.mxu0
    %v581 = vadd.f32 0.0, %v580
    %582 = vmatmul.f32.gmra.mxu0 %v526
    %v583 = vpop.f32.mrf.mxu0
    %v584 = vadd.f32 0.0, %v583
    %585 = vmatmul.f32.gmra.mxu0 %v527
    %v586 = vpop.f32.mrf.mxu0
    %v587 = vadd.f32 0.0, %v586
    %588 = vmatmul.f32.gmra.mxu0 %v528
    %v589 = vpop.f32.mrf.mxu0
    %v590 = vadd.f32 0.0, %v589
    %591 = vdwg.mxu0
    %592 = vmatpush.msra.mxu0 %v471
    %593 = vmatpush.msra.mxu0 %v470
    %594 = vmatpush.msra.mxu0 %v469
    %595 = vmatpush.msra.mxu0 %v468
    %596 = vmatpush.msra.mxu0 %v467
    %597 = vmatpush.msra.mxu0 %v466
    %598 = vmatpush.msra.mxu0 %v465
    %599 = vmatpush.msra.mxu0 %v464
    %600 = vmatpush.msra.mxu0 %v463
    %601 = vmatpush.msra.mxu0 %v462
    %602 = vmatpush.msra.mxu0 %v461
    %603 = vmatpush.msra.mxu0 %v460
    %604 = vmatpush.msra.mxu0 %v459
    %605 = vmatpush.msra.mxu0 %v458
    %606 = vmatpush.msra.mxu0 %v457
    %607 = vmatpush.msra.mxu0 %v456
    %608 = vmatmul.f32.gmra.mxu0 %v436
    %v609 = vpop.f32.mrf.mxu0
    %v610 = vadd.f32 %v581, %v609
    %611 = vmatmul.f32.gmra.mxu0 %v437
    %v612 = vpop.f32.mrf.mxu0
    %v613 = vadd.f32 %v584, %v612
    %614 = vmatmul.f32.gmra.mxu0 %v438
    %v615 = vpop.f32.mrf.mxu0
    %v616 = vadd.f32 %v587, %v615
    %617 = vmatmul.f32.gmra.mxu0 %v439
    %v618 = vpop.f32.mrf.mxu0
    %v619 = vadd.f32 %v590, %v618
    %620 = vdwg.mxu0
    %621 = vmatpush.msra.mxu0 %v487
    %622 = vmatpush.msra.mxu0 %v486
    %623 = vmatpush.msra.mxu0 %v485
    %624 = vmatpush.msra.mxu0 %v484
    %625 = vmatpush.msra.mxu0 %v483
    %626 = vmatpush.msra.mxu0 %v482
    %627 = vmatpush.msra.mxu0 %v481
    %628 = vmatpush.msra.mxu0 %v480
    %629 = vmatpush.msra.mxu0 %v479
    %630 = vmatpush.msra.mxu0 %v478
    %631 = vmatpush.msra.mxu0 %v477
    %632 = vmatpush.msra.mxu0 %v476
    %633 = vmatpush.msra.mxu0 %v475
    %634 = vmatpush.msra.mxu0 %v474
    %635 = vmatpush.msra.mxu0 %v473
    %636 = vmatpush.msra.mxu0 %v472
    %637 = vmatmul.f32.gmra.mxu0 %v559
    %v638 = vpop.f32.mrf.mxu0
    %v639 = vadd.f32 %v610, %v638
    %640 = vmatmul.f32.gmra.mxu0 %v560
    %v641 = vpop.f32.mrf.mxu0
    %v642 = vadd.f32 %v613, %v641
    %643 = vmatmul.f32.gmra.mxu0 %v561
    %v644 = vpop.f32.mrf.mxu0
    %v645 = vadd.f32 %v616, %v644
    %646 = vmatmul.f32.gmra.mxu0 %v562
    %v647 = vpop.f32.mrf.mxu0
    %v648 = vadd.f32 %v619, %v647
    %649 = vdwg.mxu0
    %v650 = vperm.slane %v424, 0
    %v651 = vmul.f32 %v639, %v650
    %v652 = vmul.f32 %v642, %v650
    %v653 = vmul.f32 %v645, %v650
    %v654 = vmul.f32 %v648, %v650
    %v655 = vperm.slane %v425, 0
    %v656 = vadd.f32 %v651, %v655
    %v657 = vadd.f32 %v652, %v655
    %v658 = vadd.f32 %v653, %v655
    %v659 = vadd.f32 %v654, %v655
    %v660 = vmax.f32 %v656, 0.0
    %v661 = vmax.f32 %v657, 0.0
    %v662 = vmax.f32 %v658, 0.0
    %v663 = vmax.f32 %v659, 0.0
    %s664 = scalar_lea.vmem %s6, 384
    %v665 = vld [vmem:[%s664] sm:$0xff]
    %v666 = vld [vmem:[%s664 + $0x8] sm:$0xff]
    %v667 = vld [vmem:[%s664 + $0x10] sm:$0xff]
    %v668 = vld [vmem:[%s664 + $0x18] sm:$0xff]
    %v669 = vld [vmem:[%s664 + $0x20] sm:$0xff]
    %v670 = vld [vmem:[%s664 + $0x28] sm:$0xff]
    %v671 = vld [vmem:[%s664 + $0x30] sm:$0xff]
    %v672 = vld [vmem:[%s664 + $0x38] sm:$0xff]
    %v673 = vld [vmem:[%s664 + $0x40] sm:$0xff]
    %v674 = vld [vmem:[%s664 + $0x48] sm:$0xff]
    %v675 = vld [vmem:[%s664 + $0x50] sm:$0xff]
    %v676 = vld [vmem:[%s664 + $0x58] sm:$0xff]
    %v677 = vld [vmem:[%s664 + $0x60] sm:$0xff]
    %v678 = vld [vmem:[%s664 + $0x68] sm:$0xff]
    %v679 = vld [vmem:[%s664 + $0x70] sm:$0xff]
    %v680 = vld [vmem:[%s664 + $0x78] sm:$0xff]
    %v681 = vld [vmem:[%s664 + $0x80] sm:$0xff]
    %v682 = vld [vmem:[%s664 + $0x88] sm:$0xff]
    %v683 = vld [vmem:[%s664 + $0x90] sm:$0xff]
    %v684 = vld [vmem:[%s664 + $0x98] sm:$0xff]
    %v685 = vld [vmem:[%s664 + $0xa0] sm:$0xff]
    %v686 = vld [vmem:[%s664 + $0xa8] sm:$0xff]
    %v687 = vld [vmem:[%s664 + $0xb0] sm:$0xff]
    %v688 = vld [vmem:[%s664 + $0xb8] sm:$0xff]
    %v689 = vld [vmem:[%s664 + $0xc0] sm:$0xff]
    %v690 = vld [vmem:[%s664 + $0xc8] sm:$0xff]
    %v691 = vld [vmem:[%s664 + $0xd0] sm:$0xff]
    %v692 = vld [vmem:[%s664 + $0xd8] sm:$0xff]
    %v693 = vld [vmem:[%s664 + $0xe0] sm:$0xff]
    %v694 = vld [vmem:[%s664 + $0xe8] sm:$0xff]
    %v695 = vld [vmem:[%s664 + $0xf0] sm:$0xff]
    %v696 = vld [vmem:[%s664 + $0xf8] sm:$0xff]
    %v697 = vld [vmem:[%s664 + $0x100] sm:$0xff]
    %v698 = vld [vmem:[%s664 + $0x108] sm:$0xff]
    %v699 = vld [vmem:[%s664 + $0x110] sm:$0xff]
    %v700 = vld [vmem:[%s664 + $0x118] sm:$0xff]
    %v701 = vld [vmem:[%s664 + $0x120] sm:$0xff]
    %v702 = vld [vmem:[%s664 + $0x128] sm:$0xff]
    %v703 = vld [vmem:[%s664 + $0x130] sm:$0xff]
    %v704 = vld [vmem:[%s664 + $0x138] sm:$0xff]
    %v705 = vld [vmem:[%s664 + $0x140] sm:$0xff]
    %v706 = vld [vmem:[%s664 + $0x148] sm:$0xff]
    %v707 = vld [vmem:[%s664 + $0x150] sm:$0xff]
    %v708 = vld [vmem:[%s664 + $0x158] sm:$0xff]
    %v709 = vld [vmem:[%s664 + $0x160] sm:$0xff]
    %v710 = vld [vmem:[%s664 + $0x168] sm:$0xff]
    %v711 = vld [vmem:[%s664 + $0x170] sm:$0xff]
    %v712 = vld [vmem:[%s664 + $0x178] sm:$0xff]
    %v717 = vrot.slane %v660, 7
    %v718 = vrot.slane %v661, 7
    %v719 = vsel %vm492, %v717, %v718
    %v720 = vrot.slane %v662, 7
    %v721 = vsel %vm492, %v718, %v720
    %v722 = vrot.slane %v663, 7
    %v723 = vsel %vm492, %v720, %v722
    %v728 = vsel %vm492, 0.0, %v717
    %v729 = vmul.f32 %v728, %v508
    %v730 = vmul.f32 %v719, %v513
    %v731 = vmul.f32 %v721, %v518
    %v732 = vmul.f32 %v723, %v523
    %v733 = vrot.slane %v660, 1
    %v734 = vrot.slane %v661, 1
    %v735 = vsel %vm529, %v733, %v734
    %v736 = vrot.slane %v662, 1
    %v737 = vsel %vm529, %v734, %v736
    %v738 = vrot.slane %v663, 1
    %v739 = vsel %vm529, %v736, %v738
    %v744 = vsel %vm541, %v738, 0.0
    %v745 = vmul.f32 %v735, %v545
    %v746 = vmul.f32 %v737, %v549
    %v747 = vmul.f32 %v739, %v553
    %v748 = vmul.f32 %v744, %v557
    %749 = vmatpush.msra.mxu0 %v680
    %750 = vmatpush.msra.mxu0 %v679
    %751 = vmatpush.msra.mxu0 %v678
    %752 = vmatpush.msra.mxu0 %v677
    %753 = vmatpush.msra.mxu0 %v676
    %754 = vmatpush.msra.mxu0 %v675
    %755 = vmatpush.msra.mxu0 %v674
    %756 = vmatpush.msra.mxu0 %v673
    %757 = vmatpush.msra.mxu0 %v672
    %758 = vmatpush.msra.mxu0 %v671
    %759 = vmatpush.msra.mxu0 %v670
    %760 = vmatpush.msra.mxu0 %v669
    %761 = vmatpush.msra.mxu0 %v668
    %762 = vmatpush.msra.mxu0 %v667
    %763 = vmatpush.msra.mxu0 %v666
    %764 = vmatpush.msra.mxu0 %v665
    %765 = vmatmul.f32.gmra.mxu0 %v729
    %v766 = vpop.f32.mrf.mxu0
    %v767 = vadd.f32 0.0, %v766
    %768 = vmatmul.f32.gmra.mxu0 %v730
    %v769 = vpop.f32.mrf.mxu0
    %v770 = vadd.f32 0.0, %v769
    %771 = vmatmul.f32.gmra.mxu0 %v731
    %v772 = vpop.f32.mrf.mxu0
    %v773 = vadd.f32 0.0, %v772
    %774 = vmatmul.f32.gmra.mxu0 %v732
    %v775 = vpop.f32.mrf.mxu0
    %v776 = vadd.f32 0.0, %v775
    %777 = vdwg.mxu0
    %778 = vmatpush.msra.mxu0 %v696
    %779 = vmatpush.msra.mxu0 %v695
    %780 = vmatpush.msra.mxu0 %v694
    %781 = vmatpush.msra.mxu0 %v693
    %782 = vmatpush.msra.mxu0 %v692
    %783 = vmatpush.msra.mxu0 %v691
    %784 = vmatpush.msra.mxu0 %v690
    %785 = vmatpush.msra.mxu0 %v689
    %786 = vmatpush.msra.mxu0 %v688
    %787 = vmatpush.msra.mxu0 %v687
    %788 = vmatpush.msra.mxu0 %v686
    %789 = vmatpush.msra.mxu0 %v685
    %790 = vmatpush.msra.mxu0 %v684
    %791 = vmatpush.msra.mxu0 %v683
    %792 = vmatpush.msra.mxu0 %v682
    %793 = vmatpush.msra.mxu0 %v681
    %794 = vmatmul.f32.gmra.mxu0 %v660
    %v795 = vpop.f32.mrf.mxu0
    %v796 = vadd.f32 %v767, %v795
    %797 = vmatmul.f32.gmra.mxu0 %v661
    %v798 = vpop.f32.mrf.mxu0
    %v799 = vadd.f32 %v770, %v798
    %800 = vmatmul.f32.gmra.mxu0 %v662
    %v801 = vpop.f32.mrf.mxu0
    %v802 = vadd.f32 %v773, %v801
    %803 = vmatmul.f32.gmra.mxu0 %v663
    %v804 = vpop.f32.mrf.mxu0
    %v805 = vadd.f32 %v776, %v804
    %806 = vdwg.mxu0
    %807 = vmatpush.msra.mxu0 %v712
    %808 = vmatpush.msra.mxu0 %v711
    %809 = vmatpush.msra.mxu0 %v710
    %810 = vmatpush.msra.mxu0 %v709
    %811 = vmatpush.msra.mxu0 %v708
    %812 = vmatpush.msra.mxu0 %v707
    %813 = vmatpush.msra.mxu0 %v706
    %814 = vmatpush.msra.mxu0 %v705
    %815 = vmatpush.msra.mxu0 %v704
    %816 = vmatpush.msra.mxu0 %v703
    %817 = vmatpush.msra.mxu0 %v702
    %818 = vmatpush.msra.mxu0 %v701
    %819 = vmatpush.msra.mxu0 %v700
    %820 = vmatpush.msra.mxu0 %v699
    %821 = vmatpush.msra.mxu0 %v698
    %822 = vmatpush.msra.mxu0 %v697
    %823 = vmatmul.f32.gmra.mxu0 %v745
    %v824 = vpop.f32.mrf.mxu0
    %v825 = vadd.f32 %v796, %v824
    %826 = vmatmul.f32.gmra.mxu0 %v746
    %v827 = vpop.f32.mrf.mxu0
    %v828 = vadd.f32 %v799, %v827
    %829 = vmatmul.f32.gmra.mxu0 %v747
    %v830 = vpop.f32.mrf.mxu0
    %v831 = vadd.f32 %v802, %v830
    %832 = vmatmul.f32.gmra.mxu0 %v748
    %v833 = vpop.f32.mrf.mxu0
    %v834 = vadd.f32 %v805, %v833
    %835 = vdwg.mxu0
    %v836 = vadd.f32 %v407, %v825
    %v837 = vadd.f32 %v410, %v828
    %v838 = vadd.f32 %v413, %v831
    %v839 = vadd.f32 %v416, %v834
    %v840 = vld [vmem:[%s5 + $0x4] sm:$0x1]
    %v841 = vld [vmem:[%s5 + $0x5] sm:$0x1]
    %v842 = vld [vmem:[%s5 + $0x6] sm:$0x1]
    %v843 = vld [vmem:[%s5 + $0x7] sm:$0x1]
    %v844 = vperm.slane %v840, 0
    %v845 = vmul.f32 %v836, %v844
    %v846 = vmul.f32 %v837, %v844
    %v847 = vmul.f32 %v838, %v844
    %v848 = vmul.f32 %v839, %v844
    %v849 = vperm.slane %v841, 0
    %v850 = vadd.f32 %v845, %v849
    %v851 = vadd.f32 %v846, %v849
    %v852 = vadd.f32 %v847, %v849
    %v853 = vadd.f32 %v848, %v849
    %v854 = vmax.f32 %v850, 0.0
    %v855 = vmax.f32 %v851, 0.0
    %v856 = vmax.f32 %v852, 0.0
    %v857 = vmax.f32 %v853, 0.0
    %s858 = scalar_lea.vmem %s6, 768
    %v859 = vld [vmem:[%s858] sm:$0xff]
    %v860 = vld [vmem:[%s858 + $0x8] sm:$0xff]
    %v861 = vld [vmem:[%s858 + $0x10] sm:$0xff]
    %v862 = vld [vmem:[%s858 + $0x18] sm:$0xff]
    %v863 = vld [vmem:[%s858 + $0x20] sm:$0xff]
    %v864 = vld [vmem:[%s858 + $0x28] sm:$0xff]
    %v865 = vld [vmem:[%s858 + $0x30] sm:$0xff]
    %v866 = vld [vmem:[%s858 + $0x38] sm:$0xff]
    %v867 = vld [vmem:[%s858 + $0x40] sm:$0xff]
    %v868 = vld [vmem:[%s858 + $0x48] sm:$0xff]
    %v869 = vld [vmem:[%s858 + $0x50] sm:$0xff]
    %v870 = vld [vmem:[%s858 + $0x58] sm:$0xff]
    %v871 = vld [vmem:[%s858 + $0x60] sm:$0xff]
    %v872 = vld [vmem:[%s858 + $0x68] sm:$0xff]
    %v873 = vld [vmem:[%s858 + $0x70] sm:$0xff]
    %v874 = vld [vmem:[%s858 + $0x78] sm:$0xff]
    %v875 = vld [vmem:[%s858 + $0x80] sm:$0xff]
    %v876 = vld [vmem:[%s858 + $0x88] sm:$0xff]
    %v877 = vld [vmem:[%s858 + $0x90] sm:$0xff]
    %v878 = vld [vmem:[%s858 + $0x98] sm:$0xff]
    %v879 = vld [vmem:[%s858 + $0xa0] sm:$0xff]
    %v880 = vld [vmem:[%s858 + $0xa8] sm:$0xff]
    %v881 = vld [vmem:[%s858 + $0xb0] sm:$0xff]
    %v882 = vld [vmem:[%s858 + $0xb8] sm:$0xff]
    %v883 = vld [vmem:[%s858 + $0xc0] sm:$0xff]
    %v884 = vld [vmem:[%s858 + $0xc8] sm:$0xff]
    %v885 = vld [vmem:[%s858 + $0xd0] sm:$0xff]
    %v886 = vld [vmem:[%s858 + $0xd8] sm:$0xff]
    %v887 = vld [vmem:[%s858 + $0xe0] sm:$0xff]
    %v888 = vld [vmem:[%s858 + $0xe8] sm:$0xff]
    %v889 = vld [vmem:[%s858 + $0xf0] sm:$0xff]
    %v890 = vld [vmem:[%s858 + $0xf8] sm:$0xff]
    %v891 = vld [vmem:[%s858 + $0x100] sm:$0xff]
    %v892 = vld [vmem:[%s858 + $0x108] sm:$0xff]
    %v893 = vld [vmem:[%s858 + $0x110] sm:$0xff]
    %v894 = vld [vmem:[%s858 + $0x118] sm:$0xff]
    %v895 = vld [vmem:[%s858 + $0x120] sm:$0xff]
    %v896 = vld [vmem:[%s858 + $0x128] sm:$0xff]
    %v897 = vld [vmem:[%s858 + $0x130] sm:$0xff]
    %v898 = vld [vmem:[%s858 + $0x138] sm:$0xff]
    %v899 = vld [vmem:[%s858 + $0x140] sm:$0xff]
    %v900 = vld [vmem:[%s858 + $0x148] sm:$0xff]
    %v901 = vld [vmem:[%s858 + $0x150] sm:$0xff]
    %v902 = vld [vmem:[%s858 + $0x158] sm:$0xff]
    %v903 = vld [vmem:[%s858 + $0x160] sm:$0xff]
    %v904 = vld [vmem:[%s858 + $0x168] sm:$0xff]
    %v905 = vld [vmem:[%s858 + $0x170] sm:$0xff]
    %v906 = vld [vmem:[%s858 + $0x178] sm:$0xff]
    %v911 = vrot.slane %v854, 7
    %v912 = vrot.slane %v855, 7
    %v913 = vsel %vm492, %v911, %v912
    %v914 = vrot.slane %v856, 7
    %v915 = vsel %vm492, %v912, %v914
    %v916 = vrot.slane %v857, 7
    %v917 = vsel %vm492, %v914, %v916
    %v922 = vsel %vm492, 0.0, %v911
    %v923 = vmul.f32 %v922, %v508
    %v924 = vmul.f32 %v913, %v513
    %v925 = vmul.f32 %v915, %v518
    %v926 = vmul.f32 %v917, %v523
    %v927 = vrot.slane %v854, 1
    %v928 = vrot.slane %v855, 1
    %v929 = vsel %vm529, %v927, %v928
    %v930 = vrot.slane %v856, 1
    %v931 = vsel %vm529, %v928, %v930
    %v932 = vrot.slane %v857, 1
    %v933 = vsel %vm529, %v930, %v932
    %v938 = vsel %vm541, %v932, 0.0
    %v939 = vmul.f32 %v929, %v545
    %v940 = vmul.f32 %v931, %v549
    %v941 = vmul.f32 %v933, %v553
    %v942 = vmul.f32 %v938, %v557
    %943 = vmatpush.msra.mxu0 %v874
    %944 = vmatpush.msra.mxu0 %v873
    %945 = vmatpush.msra.mxu0 %v872
    %946 = vmatpush.msra.mxu0 %v871
    %947 = vmatpush.msra.mxu0 %v870
    %948 = vmatpush.msra.mxu0 %v869
    %949 = vmatpush.msra.mxu0 %v868
    %950 = vmatpush.msra.mxu0 %v867
    %951 = vmatpush.msra.mxu0 %v866
    %952 = vmatpush.msra.mxu0 %v865
    %953 = vmatpush.msra.mxu0 %v864
    %954 = vmatpush.msra.mxu0 %v863
    %955 = vmatpush.msra.mxu0 %v862
    %956 = vmatpush.msra.mxu0 %v861
    %957 = vmatpush.msra.mxu0 %v860
    %958 = vmatpush.msra.mxu0 %v859
    %959 = vmatmul.f32.gmra.mxu0 %v923
    %v960 = vpop.f32.mrf.mxu0
    %v961 = vadd.f32 0.0, %v960
    %962 = vmatmul.f32.gmra.mxu0 %v924
    %v963 = vpop.f32.mrf.mxu0
    %v964 = vadd.f32 0.0, %v963
    %965 = vmatmul.f32.gmra.mxu0 %v925
    %v966 = vpop.f32.mrf.mxu0
    %v967 = vadd.f32 0.0, %v966
    %968 = vmatmul.f32.gmra.mxu0 %v926
    %v969 = vpop.f32.mrf.mxu0
    %v970 = vadd.f32 0.0, %v969
    %971 = vdwg.mxu0
    %972 = vmatpush.msra.mxu0 %v890
    %973 = vmatpush.msra.mxu0 %v889
    %974 = vmatpush.msra.mxu0 %v888
    %975 = vmatpush.msra.mxu0 %v887
    %976 = vmatpush.msra.mxu0 %v886
    %977 = vmatpush.msra.mxu0 %v885
    %978 = vmatpush.msra.mxu0 %v884
    %979 = vmatpush.msra.mxu0 %v883
    %980 = vmatpush.msra.mxu0 %v882
    %981 = vmatpush.msra.mxu0 %v881
    %982 = vmatpush.msra.mxu0 %v880
    %983 = vmatpush.msra.mxu0 %v879
    %984 = vmatpush.msra.mxu0 %v878
    %985 = vmatpush.msra.mxu0 %v877
    %986 = vmatpush.msra.mxu0 %v876
    %987 = vmatpush.msra.mxu0 %v875
    %988 = vmatmul.f32.gmra.mxu0 %v854
    %v989 = vpop.f32.mrf.mxu0
    %v990 = vadd.f32 %v961, %v989
    %991 = vmatmul.f32.gmra.mxu0 %v855
    %v992 = vpop.f32.mrf.mxu0
    %v993 = vadd.f32 %v964, %v992
    %994 = vmatmul.f32.gmra.mxu0 %v856
    %v995 = vpop.f32.mrf.mxu0
    %v996 = vadd.f32 %v967, %v995
    %997 = vmatmul.f32.gmra.mxu0 %v857
    %v998 = vpop.f32.mrf.mxu0
    %v999 = vadd.f32 %v970, %v998
    %1000 = vdwg.mxu0
    %1001 = vmatpush.msra.mxu0 %v906
    %1002 = vmatpush.msra.mxu0 %v905
    %1003 = vmatpush.msra.mxu0 %v904
    %1004 = vmatpush.msra.mxu0 %v903
    %1005 = vmatpush.msra.mxu0 %v902
    %1006 = vmatpush.msra.mxu0 %v901
    %1007 = vmatpush.msra.mxu0 %v900
    %1008 = vmatpush.msra.mxu0 %v899
    %1009 = vmatpush.msra.mxu0 %v898
    %1010 = vmatpush.msra.mxu0 %v897
    %1011 = vmatpush.msra.mxu0 %v896
    %1012 = vmatpush.msra.mxu0 %v895
    %1013 = vmatpush.msra.mxu0 %v894
    %1014 = vmatpush.msra.mxu0 %v893
    %1015 = vmatpush.msra.mxu0 %v892
    %1016 = vmatpush.msra.mxu0 %v891
    %1017 = vmatmul.f32.gmra.mxu0 %v939
    %v1018 = vpop.f32.mrf.mxu0
    %v1019 = vadd.f32 %v990, %v1018
    %1020 = vmatmul.f32.gmra.mxu0 %v940
    %v1021 = vpop.f32.mrf.mxu0
    %v1022 = vadd.f32 %v993, %v1021
    %1023 = vmatmul.f32.gmra.mxu0 %v941
    %v1024 = vpop.f32.mrf.mxu0
    %v1025 = vadd.f32 %v996, %v1024
    %1026 = vmatmul.f32.gmra.mxu0 %v942
    %v1027 = vpop.f32.mrf.mxu0
    %v1028 = vadd.f32 %v999, %v1027
    %1029 = vdwg.mxu0
    %v1030 = vperm.slane %v842, 0
    %v1031 = vmul.f32 %v1019, %v1030
    %v1032 = vmul.f32 %v1022, %v1030
    %v1033 = vmul.f32 %v1025, %v1030
    %v1034 = vmul.f32 %v1028, %v1030
    %v1035 = vperm.slane %v843, 0
    %v1036 = vadd.f32 %v1031, %v1035
    %v1037 = vadd.f32 %v1032, %v1035
    %v1038 = vadd.f32 %v1033, %v1035
    %v1039 = vadd.f32 %v1034, %v1035
    %v1040 = vmax.f32 %v1036, 0.0
    %v1041 = vmax.f32 %v1037, 0.0
    %v1042 = vmax.f32 %v1038, 0.0
    %v1043 = vmax.f32 %v1039, 0.0
    %s1044 = scalar_lea.vmem %s6, 1152
    %v1045 = vld [vmem:[%s1044] sm:$0xff]
    %v1046 = vld [vmem:[%s1044 + $0x8] sm:$0xff]
    %v1047 = vld [vmem:[%s1044 + $0x10] sm:$0xff]
    %v1048 = vld [vmem:[%s1044 + $0x18] sm:$0xff]
    %v1049 = vld [vmem:[%s1044 + $0x20] sm:$0xff]
    %v1050 = vld [vmem:[%s1044 + $0x28] sm:$0xff]
    %v1051 = vld [vmem:[%s1044 + $0x30] sm:$0xff]
    %v1052 = vld [vmem:[%s1044 + $0x38] sm:$0xff]
    %v1053 = vld [vmem:[%s1044 + $0x40] sm:$0xff]
    %v1054 = vld [vmem:[%s1044 + $0x48] sm:$0xff]
    %v1055 = vld [vmem:[%s1044 + $0x50] sm:$0xff]
    %v1056 = vld [vmem:[%s1044 + $0x58] sm:$0xff]
    %v1057 = vld [vmem:[%s1044 + $0x60] sm:$0xff]
    %v1058 = vld [vmem:[%s1044 + $0x68] sm:$0xff]
    %v1059 = vld [vmem:[%s1044 + $0x70] sm:$0xff]
    %v1060 = vld [vmem:[%s1044 + $0x78] sm:$0xff]
    %v1061 = vld [vmem:[%s1044 + $0x80] sm:$0xff]
    %v1062 = vld [vmem:[%s1044 + $0x88] sm:$0xff]
    %v1063 = vld [vmem:[%s1044 + $0x90] sm:$0xff]
    %v1064 = vld [vmem:[%s1044 + $0x98] sm:$0xff]
    %v1065 = vld [vmem:[%s1044 + $0xa0] sm:$0xff]
    %v1066 = vld [vmem:[%s1044 + $0xa8] sm:$0xff]
    %v1067 = vld [vmem:[%s1044 + $0xb0] sm:$0xff]
    %v1068 = vld [vmem:[%s1044 + $0xb8] sm:$0xff]
    %v1069 = vld [vmem:[%s1044 + $0xc0] sm:$0xff]
    %v1070 = vld [vmem:[%s1044 + $0xc8] sm:$0xff]
    %v1071 = vld [vmem:[%s1044 + $0xd0] sm:$0xff]
    %v1072 = vld [vmem:[%s1044 + $0xd8] sm:$0xff]
    %v1073 = vld [vmem:[%s1044 + $0xe0] sm:$0xff]
    %v1074 = vld [vmem:[%s1044 + $0xe8] sm:$0xff]
    %v1075 = vld [vmem:[%s1044 + $0xf0] sm:$0xff]
    %v1076 = vld [vmem:[%s1044 + $0xf8] sm:$0xff]
    %v1077 = vld [vmem:[%s1044 + $0x100] sm:$0xff]
    %v1078 = vld [vmem:[%s1044 + $0x108] sm:$0xff]
    %v1079 = vld [vmem:[%s1044 + $0x110] sm:$0xff]
    %v1080 = vld [vmem:[%s1044 + $0x118] sm:$0xff]
    %v1081 = vld [vmem:[%s1044 + $0x120] sm:$0xff]
    %v1082 = vld [vmem:[%s1044 + $0x128] sm:$0xff]
    %v1083 = vld [vmem:[%s1044 + $0x130] sm:$0xff]
    %v1084 = vld [vmem:[%s1044 + $0x138] sm:$0xff]
    %v1085 = vld [vmem:[%s1044 + $0x140] sm:$0xff]
    %v1086 = vld [vmem:[%s1044 + $0x148] sm:$0xff]
    %v1087 = vld [vmem:[%s1044 + $0x150] sm:$0xff]
    %v1088 = vld [vmem:[%s1044 + $0x158] sm:$0xff]
    %v1089 = vld [vmem:[%s1044 + $0x160] sm:$0xff]
    %v1090 = vld [vmem:[%s1044 + $0x168] sm:$0xff]
    %v1091 = vld [vmem:[%s1044 + $0x170] sm:$0xff]
    %v1092 = vld [vmem:[%s1044 + $0x178] sm:$0xff]
    %v1097 = vrot.slane %v1040, 7
    %v1098 = vrot.slane %v1041, 7
    %v1099 = vsel %vm492, %v1097, %v1098
    %v1100 = vrot.slane %v1042, 7
    %v1101 = vsel %vm492, %v1098, %v1100
    %v1102 = vrot.slane %v1043, 7
    %v1103 = vsel %vm492, %v1100, %v1102
    %v1108 = vsel %vm492, 0.0, %v1097
    %v1109 = vmul.f32 %v1108, %v508
    %v1110 = vmul.f32 %v1099, %v513
    %v1111 = vmul.f32 %v1101, %v518
    %v1112 = vmul.f32 %v1103, %v523
    %v1113 = vrot.slane %v1040, 1
    %v1114 = vrot.slane %v1041, 1
    %v1115 = vsel %vm529, %v1113, %v1114
    %v1116 = vrot.slane %v1042, 1
    %v1117 = vsel %vm529, %v1114, %v1116
    %v1118 = vrot.slane %v1043, 1
    %v1119 = vsel %vm529, %v1116, %v1118
    %v1124 = vsel %vm541, %v1118, 0.0
    %v1125 = vmul.f32 %v1115, %v545
    %v1126 = vmul.f32 %v1117, %v549
    %v1127 = vmul.f32 %v1119, %v553
    %v1128 = vmul.f32 %v1124, %v557
    %1129 = vmatpush.msra.mxu0 %v1060
    %1130 = vmatpush.msra.mxu0 %v1059
    %1131 = vmatpush.msra.mxu0 %v1058
    %1132 = vmatpush.msra.mxu0 %v1057
    %1133 = vmatpush.msra.mxu0 %v1056
    %1134 = vmatpush.msra.mxu0 %v1055
    %1135 = vmatpush.msra.mxu0 %v1054
    %1136 = vmatpush.msra.mxu0 %v1053
    %1137 = vmatpush.msra.mxu0 %v1052
    %1138 = vmatpush.msra.mxu0 %v1051
    %1139 = vmatpush.msra.mxu0 %v1050
    %1140 = vmatpush.msra.mxu0 %v1049
    %1141 = vmatpush.msra.mxu0 %v1048
    %1142 = vmatpush.msra.mxu0 %v1047
    %1143 = vmatpush.msra.mxu0 %v1046
    %1144 = vmatpush.msra.mxu0 %v1045
    %1145 = vmatmul.f32.gmra.mxu0 %v1109
    %v1146 = vpop.f32.mrf.mxu0
    %v1147 = vadd.f32 0.0, %v1146
    %1148 = vmatmul.f32.gmra.mxu0 %v1110
    %v1149 = vpop.f32.mrf.mxu0
    %v1150 = vadd.f32 0.0, %v1149
    %1151 = vmatmul.f32.gmra.mxu0 %v1111
    %v1152 = vpop.f32.mrf.mxu0
    %v1153 = vadd.f32 0.0, %v1152
    %1154 = vmatmul.f32.gmra.mxu0 %v1112
    %v1155 = vpop.f32.mrf.mxu0
    %v1156 = vadd.f32 0.0, %v1155
    %1157 = vdwg.mxu0
    %1158 = vmatpush.msra.mxu0 %v1076
    %1159 = vmatpush.msra.mxu0 %v1075
    %1160 = vmatpush.msra.mxu0 %v1074
    %1161 = vmatpush.msra.mxu0 %v1073
    %1162 = vmatpush.msra.mxu0 %v1072
    %1163 = vmatpush.msra.mxu0 %v1071
    %1164 = vmatpush.msra.mxu0 %v1070
    %1165 = vmatpush.msra.mxu0 %v1069
    %1166 = vmatpush.msra.mxu0 %v1068
    %1167 = vmatpush.msra.mxu0 %v1067
    %1168 = vmatpush.msra.mxu0 %v1066
    %1169 = vmatpush.msra.mxu0 %v1065
    %1170 = vmatpush.msra.mxu0 %v1064
    %1171 = vmatpush.msra.mxu0 %v1063
    %1172 = vmatpush.msra.mxu0 %v1062
    %1173 = vmatpush.msra.mxu0 %v1061
    %1174 = vmatmul.f32.gmra.mxu0 %v1040
    %v1175 = vpop.f32.mrf.mxu0
    %v1176 = vadd.f32 %v1147, %v1175
    %1177 = vmatmul.f32.gmra.mxu0 %v1041
    %v1178 = vpop.f32.mrf.mxu0
    %v1179 = vadd.f32 %v1150, %v1178
    %1180 = vmatmul.f32.gmra.mxu0 %v1042
    %v1181 = vpop.f32.mrf.mxu0
    %v1182 = vadd.f32 %v1153, %v1181
    %1183 = vmatmul.f32.gmra.mxu0 %v1043
    %v1184 = vpop.f32.mrf.mxu0
    %v1185 = vadd.f32 %v1156, %v1184
    %1186 = vdwg.mxu0
    %1187 = vmatpush.msra.mxu0 %v1092
    %1188 = vmatpush.msra.mxu0 %v1091
    %1189 = vmatpush.msra.mxu0 %v1090
    %1190 = vmatpush.msra.mxu0 %v1089
    %1191 = vmatpush.msra.mxu0 %v1088
    %1192 = vmatpush.msra.mxu0 %v1087
    %1193 = vmatpush.msra.mxu0 %v1086
    %1194 = vmatpush.msra.mxu0 %v1085
    %1195 = vmatpush.msra.mxu0 %v1084
    %1196 = vmatpush.msra.mxu0 %v1083
    %1197 = vmatpush.msra.mxu0 %v1082
    %1198 = vmatpush.msra.mxu0 %v1081
    %1199 = vmatpush.msra.mxu0 %v1080
    %1200 = vmatpush.msra.mxu0 %v1079
    %1201 = vmatpush.msra.mxu0 %v1078
    %1202 = vmatpush.msra.mxu0 %v1077
    %1203 = vmatmul.f32.gmra.mxu0 %v1125
    %v1204 = vpop.f32.mrf.mxu0
    %v1205 = vadd.f32 %v1176, %v1204
    %1206 = vmatmul.f32.gmra.mxu0 %v1126
    %v1207 = vpop.f32.mrf.mxu0
    %v1208 = vadd.f32 %v1179, %v1207
    %1209 = vmatmul.f32.gmra.mxu0 %v1127
    %v1210 = vpop.f32.mrf.mxu0
    %v1211 = vadd.f32 %v1182, %v1210
    %1212 = vmatmul.f32.gmra.mxu0 %v1128
    %v1213 = vpop.f32.mrf.mxu0
    %v1214 = vadd.f32 %v1185, %v1213
    %1215 = vdwg.mxu0
    %v1216 = vadd.f32 %v836, %v1205
    %v1217 = vadd.f32 %v837, %v1208
    %v1218 = vadd.f32 %v838, %v1211
    %v1219 = vadd.f32 %v839, %v1214
    %v1220 = vld [vmem:[%s5 + $0x8] sm:$0x1]
    %v1221 = vld [vmem:[%s5 + $0x9] sm:$0x1]
    %v1222 = vld [vmem:[%s5 + $0xa] sm:$0x1]
    %v1223 = vld [vmem:[%s5 + $0xb] sm:$0x1]
    %v1224 = vperm.slane %v1220, 0
    %v1225 = vmul.f32 %v1216, %v1224
    %v1226 = vmul.f32 %v1217, %v1224
    %v1227 = vmul.f32 %v1218, %v1224
    %v1228 = vmul.f32 %v1219, %v1224
    %v1229 = vperm.slane %v1221, 0
    %v1230 = vadd.f32 %v1225, %v1229
    %v1231 = vadd.f32 %v1226, %v1229
    %v1232 = vadd.f32 %v1227, %v1229
    %v1233 = vadd.f32 %v1228, %v1229
    %v1234 = vmax.f32 %v1230, 0.0
    %v1235 = vmax.f32 %v1231, 0.0
    %v1236 = vmax.f32 %v1232, 0.0
    %v1237 = vmax.f32 %v1233, 0.0
    %s1238 = scalar_lea.vmem %s6, 1536
    %v1239 = vld [vmem:[%s1238] sm:$0xff]
    %v1240 = vld [vmem:[%s1238 + $0x8] sm:$0xff]
    %v1241 = vld [vmem:[%s1238 + $0x10] sm:$0xff]
    %v1242 = vld [vmem:[%s1238 + $0x18] sm:$0xff]
    %v1243 = vld [vmem:[%s1238 + $0x20] sm:$0xff]
    %v1244 = vld [vmem:[%s1238 + $0x28] sm:$0xff]
    %v1245 = vld [vmem:[%s1238 + $0x30] sm:$0xff]
    %v1246 = vld [vmem:[%s1238 + $0x38] sm:$0xff]
    %v1247 = vld [vmem:[%s1238 + $0x40] sm:$0xff]
    %v1248 = vld [vmem:[%s1238 + $0x48] sm:$0xff]
    %v1249 = vld [vmem:[%s1238 + $0x50] sm:$0xff]
    %v1250 = vld [vmem:[%s1238 + $0x58] sm:$0xff]
    %v1251 = vld [vmem:[%s1238 + $0x60] sm:$0xff]
    %v1252 = vld [vmem:[%s1238 + $0x68] sm:$0xff]
    %v1253 = vld [vmem:[%s1238 + $0x70] sm:$0xff]
    %v1254 = vld [vmem:[%s1238 + $0x78] sm:$0xff]
    %v1255 = vld [vmem:[%s1238 + $0x80] sm:$0xff]
    %v1256 = vld [vmem:[%s1238 + $0x88] sm:$0xff]
    %v1257 = vld [vmem:[%s1238 + $0x90] sm:$0xff]
    %v1258 = vld [vmem:[%s1238 + $0x98] sm:$0xff]
    %v1259 = vld [vmem:[%s1238 + $0xa0] sm:$0xff]
    %v1260 = vld [vmem:[%s1238 + $0xa8] sm:$0xff]
    %v1261 = vld [vmem:[%s1238 + $0xb0] sm:$0xff]
    %v1262 = vld [vmem:[%s1238 + $0xb8] sm:$0xff]
    %v1263 = vld [vmem:[%s1238 + $0xc0] sm:$0xff]
    %v1264 = vld [vmem:[%s1238 + $0xc8] sm:$0xff]
    %v1265 = vld [vmem:[%s1238 + $0xd0] sm:$0xff]
    %v1266 = vld [vmem:[%s1238 + $0xd8] sm:$0xff]
    %v1267 = vld [vmem:[%s1238 + $0xe0] sm:$0xff]
    %v1268 = vld [vmem:[%s1238 + $0xe8] sm:$0xff]
    %v1269 = vld [vmem:[%s1238 + $0xf0] sm:$0xff]
    %v1270 = vld [vmem:[%s1238 + $0xf8] sm:$0xff]
    %v1271 = vld [vmem:[%s1238 + $0x100] sm:$0xff]
    %v1272 = vld [vmem:[%s1238 + $0x108] sm:$0xff]
    %v1273 = vld [vmem:[%s1238 + $0x110] sm:$0xff]
    %v1274 = vld [vmem:[%s1238 + $0x118] sm:$0xff]
    %v1275 = vld [vmem:[%s1238 + $0x120] sm:$0xff]
    %v1276 = vld [vmem:[%s1238 + $0x128] sm:$0xff]
    %v1277 = vld [vmem:[%s1238 + $0x130] sm:$0xff]
    %v1278 = vld [vmem:[%s1238 + $0x138] sm:$0xff]
    %v1279 = vld [vmem:[%s1238 + $0x140] sm:$0xff]
    %v1280 = vld [vmem:[%s1238 + $0x148] sm:$0xff]
    %v1281 = vld [vmem:[%s1238 + $0x150] sm:$0xff]
    %v1282 = vld [vmem:[%s1238 + $0x158] sm:$0xff]
    %v1283 = vld [vmem:[%s1238 + $0x160] sm:$0xff]
    %v1284 = vld [vmem:[%s1238 + $0x168] sm:$0xff]
    %v1285 = vld [vmem:[%s1238 + $0x170] sm:$0xff]
    %v1286 = vld [vmem:[%s1238 + $0x178] sm:$0xff]
    %v1291 = vrot.slane %v1234, 7
    %v1292 = vrot.slane %v1235, 7
    %v1293 = vsel %vm492, %v1291, %v1292
    %v1294 = vrot.slane %v1236, 7
    %v1295 = vsel %vm492, %v1292, %v1294
    %v1296 = vrot.slane %v1237, 7
    %v1297 = vsel %vm492, %v1294, %v1296
    %v1302 = vsel %vm492, 0.0, %v1291
    %v1303 = vmul.f32 %v1302, %v508
    %v1304 = vmul.f32 %v1293, %v513
    %v1305 = vmul.f32 %v1295, %v518
    %v1306 = vmul.f32 %v1297, %v523
    %v1307 = vrot.slane %v1234, 1
    %v1308 = vrot.slane %v1235, 1
    %v1309 = vsel %vm529, %v1307, %v1308
    %v1310 = vrot.slane %v1236, 1
    %v1311 = vsel %vm529, %v1308, %v1310
    %v1312 = vrot.slane %v1237, 1
    %v1313 = vsel %vm529, %v1310, %v1312
    %v1318 = vsel %vm541, %v1312, 0.0
    %v1319 = vmul.f32 %v1309, %v545
    %v1320 = vmul.f32 %v1311, %v549
    %v1321 = vmul.f32 %v1313, %v553
    %v1322 = vmul.f32 %v1318, %v557
    %1323 = vmatpush.msra.mxu0 %v1254
    %1324 = vmatpush.msra.mxu0 %v1253
    %1325 = vmatpush.msra.mxu0 %v1252
    %1326 = vmatpush.msra.mxu0 %v1251
    %1327 = vmatpush.msra.mxu0 %v1250
    %1328 = vmatpush.msra.mxu0 %v1249
    %1329 = vmatpush.msra.mxu0 %v1248
    %1330 = vmatpush.msra.mxu0 %v1247
    %1331 = vmatpush.msra.mxu0 %v1246
    %1332 = vmatpush.msra.mxu0 %v1245
    %1333 = vmatpush.msra.mxu0 %v1244
    %1334 = vmatpush.msra.mxu0 %v1243
    %1335 = vmatpush.msra.mxu0 %v1242
    %1336 = vmatpush.msra.mxu0 %v1241
    %1337 = vmatpush.msra.mxu0 %v1240
    %1338 = vmatpush.msra.mxu0 %v1239
    %1339 = vmatmul.f32.gmra.mxu0 %v1303
    %v1340 = vpop.f32.mrf.mxu0
    %v1341 = vadd.f32 0.0, %v1340
    %1342 = vmatmul.f32.gmra.mxu0 %v1304
    %v1343 = vpop.f32.mrf.mxu0
    %v1344 = vadd.f32 0.0, %v1343
    %1345 = vmatmul.f32.gmra.mxu0 %v1305
    %v1346 = vpop.f32.mrf.mxu0
    %v1347 = vadd.f32 0.0, %v1346
    %1348 = vmatmul.f32.gmra.mxu0 %v1306
    %v1349 = vpop.f32.mrf.mxu0
    %v1350 = vadd.f32 0.0, %v1349
    %1351 = vdwg.mxu0
    %1352 = vmatpush.msra.mxu0 %v1270
    %1353 = vmatpush.msra.mxu0 %v1269
    %1354 = vmatpush.msra.mxu0 %v1268
    %1355 = vmatpush.msra.mxu0 %v1267
    %1356 = vmatpush.msra.mxu0 %v1266
    %1357 = vmatpush.msra.mxu0 %v1265
    %1358 = vmatpush.msra.mxu0 %v1264
    %1359 = vmatpush.msra.mxu0 %v1263
    %1360 = vmatpush.msra.mxu0 %v1262
    %1361 = vmatpush.msra.mxu0 %v1261
    %1362 = vmatpush.msra.mxu0 %v1260
    %1363 = vmatpush.msra.mxu0 %v1259
    %1364 = vmatpush.msra.mxu0 %v1258
    %1365 = vmatpush.msra.mxu0 %v1257
    %1366 = vmatpush.msra.mxu0 %v1256
    %1367 = vmatpush.msra.mxu0 %v1255
    %1368 = vmatmul.f32.gmra.mxu0 %v1234
    %v1369 = vpop.f32.mrf.mxu0
    %v1370 = vadd.f32 %v1341, %v1369
    %1371 = vmatmul.f32.gmra.mxu0 %v1235
    %v1372 = vpop.f32.mrf.mxu0
    %v1373 = vadd.f32 %v1344, %v1372
    %1374 = vmatmul.f32.gmra.mxu0 %v1236
    %v1375 = vpop.f32.mrf.mxu0
    %v1376 = vadd.f32 %v1347, %v1375
    %1377 = vmatmul.f32.gmra.mxu0 %v1237
    %v1378 = vpop.f32.mrf.mxu0
    %v1379 = vadd.f32 %v1350, %v1378
    %1380 = vdwg.mxu0
    %1381 = vmatpush.msra.mxu0 %v1286
    %1382 = vmatpush.msra.mxu0 %v1285
    %1383 = vmatpush.msra.mxu0 %v1284
    %1384 = vmatpush.msra.mxu0 %v1283
    %1385 = vmatpush.msra.mxu0 %v1282
    %1386 = vmatpush.msra.mxu0 %v1281
    %1387 = vmatpush.msra.mxu0 %v1280
    %1388 = vmatpush.msra.mxu0 %v1279
    %1389 = vmatpush.msra.mxu0 %v1278
    %1390 = vmatpush.msra.mxu0 %v1277
    %1391 = vmatpush.msra.mxu0 %v1276
    %1392 = vmatpush.msra.mxu0 %v1275
    %1393 = vmatpush.msra.mxu0 %v1274
    %1394 = vmatpush.msra.mxu0 %v1273
    %1395 = vmatpush.msra.mxu0 %v1272
    %1396 = vmatpush.msra.mxu0 %v1271
    %1397 = vmatmul.f32.gmra.mxu0 %v1319
    %v1398 = vpop.f32.mrf.mxu0
    %v1399 = vadd.f32 %v1370, %v1398
    %1400 = vmatmul.f32.gmra.mxu0 %v1320
    %v1401 = vpop.f32.mrf.mxu0
    %v1402 = vadd.f32 %v1373, %v1401
    %1403 = vmatmul.f32.gmra.mxu0 %v1321
    %v1404 = vpop.f32.mrf.mxu0
    %v1405 = vadd.f32 %v1376, %v1404
    %1406 = vmatmul.f32.gmra.mxu0 %v1322
    %v1407 = vpop.f32.mrf.mxu0
    %v1408 = vadd.f32 %v1379, %v1407
    %1409 = vdwg.mxu0
    %v1410 = vperm.slane %v1222, 0
    %v1411 = vmul.f32 %v1399, %v1410
    %v1412 = vmul.f32 %v1402, %v1410
    %v1413 = vmul.f32 %v1405, %v1410
    %v1414 = vmul.f32 %v1408, %v1410
    %v1415 = vperm.slane %v1223, 0
    %v1416 = vadd.f32 %v1411, %v1415
    %v1417 = vadd.f32 %v1412, %v1415
    %v1418 = vadd.f32 %v1413, %v1415
    %v1419 = vadd.f32 %v1414, %v1415
    %v1420 = vmax.f32 %v1416, 0.0
    %v1421 = vmax.f32 %v1417, 0.0
    %v1422 = vmax.f32 %v1418, 0.0
    %v1423 = vmax.f32 %v1419, 0.0
    %s1424 = scalar_lea.vmem %s6, 1920
    %v1425 = vld [vmem:[%s1424] sm:$0xff]
    %v1426 = vld [vmem:[%s1424 + $0x8] sm:$0xff]
    %v1427 = vld [vmem:[%s1424 + $0x10] sm:$0xff]
    %v1428 = vld [vmem:[%s1424 + $0x18] sm:$0xff]
    %v1429 = vld [vmem:[%s1424 + $0x20] sm:$0xff]
    %v1430 = vld [vmem:[%s1424 + $0x28] sm:$0xff]
    %v1431 = vld [vmem:[%s1424 + $0x30] sm:$0xff]
    %v1432 = vld [vmem:[%s1424 + $0x38] sm:$0xff]
    %v1433 = vld [vmem:[%s1424 + $0x40] sm:$0xff]
    %v1434 = vld [vmem:[%s1424 + $0x48] sm:$0xff]
    %v1435 = vld [vmem:[%s1424 + $0x50] sm:$0xff]
    %v1436 = vld [vmem:[%s1424 + $0x58] sm:$0xff]
    %v1437 = vld [vmem:[%s1424 + $0x60] sm:$0xff]
    %v1438 = vld [vmem:[%s1424 + $0x68] sm:$0xff]
    %v1439 = vld [vmem:[%s1424 + $0x70] sm:$0xff]
    %v1440 = vld [vmem:[%s1424 + $0x78] sm:$0xff]
    %v1441 = vld [vmem:[%s1424 + $0x80] sm:$0xff]
    %v1442 = vld [vmem:[%s1424 + $0x88] sm:$0xff]
    %v1443 = vld [vmem:[%s1424 + $0x90] sm:$0xff]
    %v1444 = vld [vmem:[%s1424 + $0x98] sm:$0xff]
    %v1445 = vld [vmem:[%s1424 + $0xa0] sm:$0xff]
    %v1446 = vld [vmem:[%s1424 + $0xa8] sm:$0xff]
    %v1447 = vld [vmem:[%s1424 + $0xb0] sm:$0xff]
    %v1448 = vld [vmem:[%s1424 + $0xb8] sm:$0xff]
    %v1449 = vld [vmem:[%s1424 + $0xc0] sm:$0xff]
    %v1450 = vld [vmem:[%s1424 + $0xc8] sm:$0xff]
    %v1451 = vld [vmem:[%s1424 + $0xd0] sm:$0xff]
    %v1452 = vld [vmem:[%s1424 + $0xd8] sm:$0xff]
    %v1453 = vld [vmem:[%s1424 + $0xe0] sm:$0xff]
    %v1454 = vld [vmem:[%s1424 + $0xe8] sm:$0xff]
    %v1455 = vld [vmem:[%s1424 + $0xf0] sm:$0xff]
    %v1456 = vld [vmem:[%s1424 + $0xf8] sm:$0xff]
    %v1457 = vld [vmem:[%s1424 + $0x100] sm:$0xff]
    %v1458 = vld [vmem:[%s1424 + $0x108] sm:$0xff]
    %v1459 = vld [vmem:[%s1424 + $0x110] sm:$0xff]
    %v1460 = vld [vmem:[%s1424 + $0x118] sm:$0xff]
    %v1461 = vld [vmem:[%s1424 + $0x120] sm:$0xff]
    %v1462 = vld [vmem:[%s1424 + $0x128] sm:$0xff]
    %v1463 = vld [vmem:[%s1424 + $0x130] sm:$0xff]
    %v1464 = vld [vmem:[%s1424 + $0x138] sm:$0xff]
    %v1465 = vld [vmem:[%s1424 + $0x140] sm:$0xff]
    %v1466 = vld [vmem:[%s1424 + $0x148] sm:$0xff]
    %v1467 = vld [vmem:[%s1424 + $0x150] sm:$0xff]
    %v1468 = vld [vmem:[%s1424 + $0x158] sm:$0xff]
    %v1469 = vld [vmem:[%s1424 + $0x160] sm:$0xff]
    %v1470 = vld [vmem:[%s1424 + $0x168] sm:$0xff]
    %v1471 = vld [vmem:[%s1424 + $0x170] sm:$0xff]
    %v1472 = vld [vmem:[%s1424 + $0x178] sm:$0xff]
    %v1477 = vrot.slane %v1420, 7
    %v1478 = vrot.slane %v1421, 7
    %v1479 = vsel %vm492, %v1477, %v1478
    %v1480 = vrot.slane %v1422, 7
    %v1481 = vsel %vm492, %v1478, %v1480
    %v1482 = vrot.slane %v1423, 7
    %v1483 = vsel %vm492, %v1480, %v1482
    %v1488 = vsel %vm492, 0.0, %v1477
    %v1489 = vmul.f32 %v1488, %v508
    %v1490 = vmul.f32 %v1479, %v513
    %v1491 = vmul.f32 %v1481, %v518
    %v1492 = vmul.f32 %v1483, %v523
    %v1493 = vrot.slane %v1420, 1
    %v1494 = vrot.slane %v1421, 1
    %v1495 = vsel %vm529, %v1493, %v1494
    %v1496 = vrot.slane %v1422, 1
    %v1497 = vsel %vm529, %v1494, %v1496
    %v1498 = vrot.slane %v1423, 1
    %v1499 = vsel %vm529, %v1496, %v1498
    %v1504 = vsel %vm541, %v1498, 0.0
    %v1505 = vmul.f32 %v1495, %v545
    %v1506 = vmul.f32 %v1497, %v549
    %v1507 = vmul.f32 %v1499, %v553
    %v1508 = vmul.f32 %v1504, %v557
    %1509 = vmatpush.msra.mxu0 %v1440
    %1510 = vmatpush.msra.mxu0 %v1439
    %1511 = vmatpush.msra.mxu0 %v1438
    %1512 = vmatpush.msra.mxu0 %v1437
    %1513 = vmatpush.msra.mxu0 %v1436
    %1514 = vmatpush.msra.mxu0 %v1435
    %1515 = vmatpush.msra.mxu0 %v1434
    %1516 = vmatpush.msra.mxu0 %v1433
    %1517 = vmatpush.msra.mxu0 %v1432
    %1518 = vmatpush.msra.mxu0 %v1431
    %1519 = vmatpush.msra.mxu0 %v1430
    %1520 = vmatpush.msra.mxu0 %v1429
    %1521 = vmatpush.msra.mxu0 %v1428
    %1522 = vmatpush.msra.mxu0 %v1427
    %1523 = vmatpush.msra.mxu0 %v1426
    %1524 = vmatpush.msra.mxu0 %v1425
    %1525 = vmatmul.f32.gmra.mxu0 %v1489
    %v1526 = vpop.f32.mrf.mxu0
    %v1527 = vadd.f32 0.0, %v1526
    %1528 = vmatmul.f32.gmra.mxu0 %v1490
    %v1529 = vpop.f32.mrf.mxu0
    %v1530 = vadd.f32 0.0, %v1529
    %1531 = vmatmul.f32.gmra.mxu0 %v1491
    %v1532 = vpop.f32.mrf.mxu0
    %v1533 = vadd.f32 0.0, %v1532
    %1534 = vmatmul.f32.gmra.mxu0 %v1492
    %v1535 = vpop.f32.mrf.mxu0
    %v1536 = vadd.f32 0.0, %v1535
    %1537 = vdwg.mxu0
    %1538 = vmatpush.msra.mxu0 %v1456
    %1539 = vmatpush.msra.mxu0 %v1455
    %1540 = vmatpush.msra.mxu0 %v1454
    %1541 = vmatpush.msra.mxu0 %v1453
    %1542 = vmatpush.msra.mxu0 %v1452
    %1543 = vmatpush.msra.mxu0 %v1451
    %1544 = vmatpush.msra.mxu0 %v1450
    %1545 = vmatpush.msra.mxu0 %v1449
    %1546 = vmatpush.msra.mxu0 %v1448
    %1547 = vmatpush.msra.mxu0 %v1447
    %1548 = vmatpush.msra.mxu0 %v1446
    %1549 = vmatpush.msra.mxu0 %v1445
    %1550 = vmatpush.msra.mxu0 %v1444
    %1551 = vmatpush.msra.mxu0 %v1443
    %1552 = vmatpush.msra.mxu0 %v1442
    %1553 = vmatpush.msra.mxu0 %v1441
    %1554 = vmatmul.f32.gmra.mxu0 %v1420
    %v1555 = vpop.f32.mrf.mxu0
    %v1556 = vadd.f32 %v1527, %v1555
    %1557 = vmatmul.f32.gmra.mxu0 %v1421
    %v1558 = vpop.f32.mrf.mxu0
    %v1559 = vadd.f32 %v1530, %v1558
    %1560 = vmatmul.f32.gmra.mxu0 %v1422
    %v1561 = vpop.f32.mrf.mxu0
    %v1562 = vadd.f32 %v1533, %v1561
    %1563 = vmatmul.f32.gmra.mxu0 %v1423
    %v1564 = vpop.f32.mrf.mxu0
    %v1565 = vadd.f32 %v1536, %v1564
    %1566 = vdwg.mxu0
    %1567 = vmatpush.msra.mxu0 %v1472
    %1568 = vmatpush.msra.mxu0 %v1471
    %1569 = vmatpush.msra.mxu0 %v1470
    %1570 = vmatpush.msra.mxu0 %v1469
    %1571 = vmatpush.msra.mxu0 %v1468
    %1572 = vmatpush.msra.mxu0 %v1467
    %1573 = vmatpush.msra.mxu0 %v1466
    %1574 = vmatpush.msra.mxu0 %v1465
    %1575 = vmatpush.msra.mxu0 %v1464
    %1576 = vmatpush.msra.mxu0 %v1463
    %1577 = vmatpush.msra.mxu0 %v1462
    %1578 = vmatpush.msra.mxu0 %v1461
    %1579 = vmatpush.msra.mxu0 %v1460
    %1580 = vmatpush.msra.mxu0 %v1459
    %1581 = vmatpush.msra.mxu0 %v1458
    %1582 = vmatpush.msra.mxu0 %v1457
    %1583 = vmatmul.f32.gmra.mxu0 %v1505
    %v1584 = vpop.f32.mrf.mxu0
    %v1585 = vadd.f32 %v1556, %v1584
    %1586 = vmatmul.f32.gmra.mxu0 %v1506
    %v1587 = vpop.f32.mrf.mxu0
    %v1588 = vadd.f32 %v1559, %v1587
    %1589 = vmatmul.f32.gmra.mxu0 %v1507
    %v1590 = vpop.f32.mrf.mxu0
    %v1591 = vadd.f32 %v1562, %v1590
    %1592 = vmatmul.f32.gmra.mxu0 %v1508
    %v1593 = vpop.f32.mrf.mxu0
    %v1594 = vadd.f32 %v1565, %v1593
    %1595 = vdwg.mxu0
    %v1596 = vadd.f32 %v1216, %v1585
    %v1597 = vadd.f32 %v1217, %v1588
    %v1598 = vadd.f32 %v1218, %v1591
    %v1599 = vadd.f32 %v1219, %v1594
    %v1604 = vrot.slane %v1596, 1
    %v1605 = vrot.slane %v1597, 1
    %v1606 = vsel %vm529, %v1604, %v1605
    %v1607 = vrot.slane %v1598, 1
    %v1608 = vsel %vm529, %v1605, %v1607
    %v1609 = vrot.slane %v1599, 1
    %v1610 = vsel %vm529, %v1607, %v1609
    %v1615 = vsel %vm541, %v1609, 0.0
    %v1617 = vrot.slane %v1606, 1
    %v1618 = vrot.slane %v1608, 1
    %v1619 = vsel %vm529, %v1617, %v1618
    %v1620 = vrot.slane %v1610, 1
    %v1621 = vsel %vm529, %v1618, %v1620
    %v1622 = vrot.slane %v1615, 1
    %v1623 = vsel %vm529, %v1620, %v1622
    %v1628 = vsel %vm541, %v1622, 0.0
    %v1629 = vld [vmem:[%s7] sm:$0xff]
    %v1630 = vld [vmem:[%s7 + $0x8] sm:$0xff]
    %v1631 = vld [vmem:[%s7 + $0x10] sm:$0xff]
    %v1632 = vld [vmem:[%s7 + $0x18] sm:$0xff]
    %v1633 = vld [vmem:[%s7 + $0x20] sm:$0xff]
    %v1634 = vld [vmem:[%s7 + $0x28] sm:$0xff]
    %v1635 = vld [vmem:[%s7 + $0x30] sm:$0xff]
    %v1636 = vld [vmem:[%s7 + $0x38] sm:$0xff]
    %v1637 = vld [vmem:[%s7 + $0x40] sm:$0xff]
    %v1638 = vld [vmem:[%s7 + $0x48] sm:$0xff]
    %v1639 = vld [vmem:[%s7 + $0x50] sm:$0xff]
    %v1640 = vld [vmem:[%s7 + $0x58] sm:$0xff]
    %v1641 = vld [vmem:[%s7 + $0x60] sm:$0xff]
    %v1642 = vld [vmem:[%s7 + $0x68] sm:$0xff]
    %v1643 = vld [vmem:[%s7 + $0x70] sm:$0xff]
    %v1644 = vld [vmem:[%s7 + $0x78] sm:$0xff]
    %v1645 = vld [vmem:[%s7 + $0x80] sm:$0xff]
    %v1646 = vld [vmem:[%s7 + $0x88] sm:$0xff]
    %v1647 = vld [vmem:[%s7 + $0x90] sm:$0xff]
    %v1648 = vld [vmem:[%s7 + $0x98] sm:$0xff]
    %v1649 = vld [vmem:[%s7 + $0xa0] sm:$0xff]
    %v1650 = vld [vmem:[%s7 + $0xa8] sm:$0xff]
    %v1651 = vld [vmem:[%s7 + $0xb0] sm:$0xff]
    %v1652 = vld [vmem:[%s7 + $0xb8] sm:$0xff]
    %v1653 = vld [vmem:[%s7 + $0xc0] sm:$0xff]
    %v1654 = vld [vmem:[%s7 + $0xc8] sm:$0xff]
    %v1655 = vld [vmem:[%s7 + $0xd0] sm:$0xff]
    %v1656 = vld [vmem:[%s7 + $0xd8] sm:$0xff]
    %v1657 = vld [vmem:[%s7 + $0xe0] sm:$0xff]
    %v1658 = vld [vmem:[%s7 + $0xe8] sm:$0xff]
    %v1659 = vld [vmem:[%s7 + $0xf0] sm:$0xff]
    %v1660 = vld [vmem:[%s7 + $0xf8] sm:$0xff]
    %v1661 = vld [vmem:[%s7 + $0x100] sm:$0xff]
    %v1662 = vld [vmem:[%s7 + $0x108] sm:$0xff]
    %v1663 = vld [vmem:[%s7 + $0x110] sm:$0xff]
    %v1664 = vld [vmem:[%s7 + $0x118] sm:$0xff]
    %v1665 = vld [vmem:[%s7 + $0x120] sm:$0xff]
    %v1666 = vld [vmem:[%s7 + $0x128] sm:$0xff]
    %v1667 = vld [vmem:[%s7 + $0x130] sm:$0xff]
    %v1668 = vld [vmem:[%s7 + $0x138] sm:$0xff]
    %v1669 = vld [vmem:[%s7 + $0x140] sm:$0xff]
    %v1670 = vld [vmem:[%s7 + $0x148] sm:$0xff]
    %v1671 = vld [vmem:[%s7 + $0x150] sm:$0xff]
    %v1672 = vld [vmem:[%s7 + $0x158] sm:$0xff]
    %v1673 = vld [vmem:[%s7 + $0x160] sm:$0xff]
    %v1674 = vld [vmem:[%s7 + $0x168] sm:$0xff]
    %v1675 = vld [vmem:[%s7 + $0x170] sm:$0xff]
    %v1676 = vld [vmem:[%s7 + $0x178] sm:$0xff]
    %v1677 = vld [vmem:[%s8] sm:$0x1]
    %v1679 = vperm.slane %v1677, 0
    %1681 = vmatpush.msra.mxu0 %v1644
    %1682 = vmatpush.msra.mxu0 %v1643
    %1683 = vmatpush.msra.mxu0 %v1642
    %1684 = vmatpush.msra.mxu0 %v1641
    %1685 = vmatpush.msra.mxu0 %v1640
    %1686 = vmatpush.msra.mxu0 %v1639
    %1687 = vmatpush.msra.mxu0 %v1638
    %1688 = vmatpush.msra.mxu0 %v1637
    %1689 = vmatpush.msra.mxu0 %v1636
    %1690 = vmatpush.msra.mxu0 %v1635
    %1691 = vmatpush.msra.mxu0 %v1634
    %1692 = vmatpush.msra.mxu0 %v1633
    %1693 = vmatpush.msra.mxu0 %v1632
    %1694 = vmatpush.msra.mxu0 %v1631
    %1695 = vmatpush.msra.mxu0 %v1630
    %1696 = vmatpush.msra.mxu0 %v1629
    %1697 = vmatmul.f32.gmra.mxu0 %v1596
    %v1698 = vpop.f32.mrf.mxu0
    %v1699 = vadd.f32 %v1679, %v1698
    %1700 = vmatmul.f32.gmra.mxu0 %v1597
    %v1701 = vpop.f32.mrf.mxu0
    %v1702 = vadd.f32 %v1679, %v1701
    %1703 = vmatmul.f32.gmra.mxu0 %v1598
    %v1704 = vpop.f32.mrf.mxu0
    %v1705 = vadd.f32 %v1679, %v1704
    %1706 = vmatmul.f32.gmra.mxu0 %v1599
    %v1707 = vpop.f32.mrf.mxu0
    %v1708 = vadd.f32 %v1679, %v1707
    %1709 = vdwg.mxu0
    %1710 = vmatpush.msra.mxu0 %v1660
    %1711 = vmatpush.msra.mxu0 %v1659
    %1712 = vmatpush.msra.mxu0 %v1658
    %1713 = vmatpush.msra.mxu0 %v1657
    %1714 = vmatpush.msra.mxu0 %v1656
    %1715 = vmatpush.msra.mxu0 %v1655
    %1716 = vmatpush.msra.mxu0 %v1654
    %1717 = vmatpush.msra.mxu0 %v1653
    %1718 = vmatpush.msra.mxu0 %v1652
    %1719 = vmatpush.msra.mxu0 %v1651
    %1720 = vmatpush.msra.mxu0 %v1650
    %1721 = vmatpush.msra.mxu0 %v1649
    %1722 = vmatpush.msra.mxu0 %v1648
    %1723 = vmatpush.msra.mxu0 %v1647
    %1724 = vmatpush.msra.mxu0 %v1646
    %1725 = vmatpush.msra.mxu0 %v1645
    %1726 = vmatmul.f32.gmra.mxu0 %v1606
    %v1727 = vpop.f32.mrf.mxu0
    %v1728 = vadd.f32 %v1699, %v1727
    %1729 = vmatmul.f32.gmra.mxu0 %v1608
    %v1730 = vpop.f32.mrf.mxu0
    %v1731 = vadd.f32 %v1702, %v1730
    %1732 = vmatmul.f32.gmra.mxu0 %v1610
    %v1733 = vpop.f32.mrf.mxu0
    %v1734 = vadd.f32 %v1705, %v1733
    %1735 = vmatmul.f32.gmra.mxu0 %v1615
    %v1736 = vpop.f32.mrf.mxu0
    %v1737 = vadd.f32 %v1708, %v1736
    %1738 = vdwg.mxu0
    %1739 = vmatpush.msra.mxu0 %v1676
    %1740 = vmatpush.msra.mxu0 %v1675
    %1741 = vmatpush.msra.mxu0 %v1674
    %1742 = vmatpush.msra.mxu0 %v1673
    %1743 = vmatpush.msra.mxu0 %v1672
    %1744 = vmatpush.msra.mxu0 %v1671
    %1745 = vmatpush.msra.mxu0 %v1670
    %1746 = vmatpush.msra.mxu0 %v1669
    %1747 = vmatpush.msra.mxu0 %v1668
    %1748 = vmatpush.msra.mxu0 %v1667
    %1749 = vmatpush.msra.mxu0 %v1666
    %1750 = vmatpush.msra.mxu0 %v1665
    %1751 = vmatpush.msra.mxu0 %v1664
    %1752 = vmatpush.msra.mxu0 %v1663
    %1753 = vmatpush.msra.mxu0 %v1662
    %1754 = vmatpush.msra.mxu0 %v1661
    %1755 = vmatmul.f32.gmra.mxu0 %v1619
    %v1756 = vpop.f32.mrf.mxu0
    %v1757 = vadd.f32 %v1728, %v1756
    %1758 = vmatmul.f32.gmra.mxu0 %v1621
    %v1759 = vpop.f32.mrf.mxu0
    %v1760 = vadd.f32 %v1731, %v1759
    %1761 = vmatmul.f32.gmra.mxu0 %v1623
    %v1762 = vpop.f32.mrf.mxu0
    %v1763 = vadd.f32 %v1734, %v1762
    %1764 = vmatmul.f32.gmra.mxu0 %v1628
    %v1765 = vpop.f32.mrf.mxu0
    %v1766 = vadd.f32 %v1737, %v1765
    %1767 = vdwg.mxu0
    %v1768 = vld [vmem:[%s10] sm:$0xff]
    %v1769 = vld [vmem:[%s10 + $0x8] sm:$0xff]
    %v1770 = vld [vmem:[%s10 + $0x10] sm:$0xff]
    %v1771 = vld [vmem:[%s10 + $0x18] sm:$0xff]
    %v1772 = vld [vmem:[%s10 + $0x20] sm:$0xff]
    %v1773 = vld [vmem:[%s10 + $0x28] sm:$0xff]
    %v1774 = vld [vmem:[%s10 + $0x30] sm:$0xf]
    %v1775 = vld [vmem:[%s10 + $0x38] sm:$0xf]
    %1777 = vset.pattern.permute.xlu0 0
    %1778 = vperm.xlu0 %1777, %v1757
    %v1779 = vpop.permute.xlu0 %1778
    %1782 = vset.pattern.permute.xlu0 0
    %1783 = vperm.xlu0 %1782, %v1760
    %v1784 = vpop.permute.xlu0 %1783
    %1787 = vset.pattern.permute.xlu0 0
    %1788 = vperm.xlu0 %1787, %v1763
    %v1789 = vpop.permute.xlu0 %1788
    %1792 = vset.pattern.permute.xlu0 0
    %1793 = vperm.xlu0 %1792, %v1766
    %v1794 = vpop.permute.xlu0 %1793
    %v1796 = vmul.f32 %v1779, %v1768
    %v1797 = vmul.f32 %v1779, %v1769
    %v1798 = vmul.f32 %v1784, %v1770
    %v1799 = vmul.f32 %v1784, %v1771
    %v1800 = vmul.f32 %v1789, %v1772
    %v1801 = vmul.f32 %v1789, %v1773
    %v1802 = vmul.f32 %v1794, %v1774
    %v1803 = vmul.f32 %v1794, %v1775
    %s1804 = scalar_lea.vmem %s10, 64
    %v1805 = vld [vmem:[%s1804] sm:$0xff]
    %v1806 = vld [vmem:[%s1804 + $0x8] sm:$0xff]
    %v1807 = vld [vmem:[%s1804 + $0x10] sm:$0xff]
    %v1808 = vld [vmem:[%s1804 + $0x18] sm:$0xff]
    %v1809 = vld [vmem:[%s1804 + $0x20] sm:$0xff]
    %v1810 = vld [vmem:[%s1804 + $0x28] sm:$0xff]
    %v1811 = vld [vmem:[%s1804 + $0x30] sm:$0xf]
    %v1812 = vld [vmem:[%s1804 + $0x38] sm:$0xf]
    %1813 = vset.pattern.permute.xlu0 1
    %1814 = vperm.xlu0 %1813, %v1757
    %v1815 = vpop.permute.xlu0 %1814
    %1817 = vset.pattern.permute.xlu0 1
    %1818 = vperm.xlu0 %1817, %v1760
    %v1819 = vpop.permute.xlu0 %1818
    %1821 = vset.pattern.permute.xlu0 1
    %1822 = vperm.xlu0 %1821, %v1763
    %v1823 = vpop.permute.xlu0 %1822
    %1825 = vset.pattern.permute.xlu0 1
    %1826 = vperm.xlu0 %1825, %v1766
    %v1827 = vpop.permute.xlu0 %1826
    %v1829 = vmul.f32 %v1815, %v1805
    %v1830 = vmul.f32 %v1815, %v1806
    %v1831 = vmul.f32 %v1819, %v1807
    %v1832 = vmul.f32 %v1819, %v1808
    %v1833 = vmul.f32 %v1823, %v1809
    %v1834 = vmul.f32 %v1823, %v1810
    %v1835 = vmul.f32 %v1827, %v1811
    %v1836 = vmul.f32 %v1827, %v1812
    %v1837 = vadd.f32 %v1796, %v1829
    %v1838 = vadd.f32 %v1797, %v1830
    %v1839 = vadd.f32 %v1798, %v1831
    %v1840 = vadd.f32 %v1799, %v1832
    %v1841 = vadd.f32 %v1800, %v1833
    %v1842 = vadd.f32 %v1801, %v1834
    %v1843 = vadd.f32 %v1802, %v1835
    %v1844 = vadd.f32 %v1803, %v1836
    %v1845 = vld [vmem:[%s11] sm:$0x3]
    %v1846 = vld [vmem:[%s12] sm:$0x3]
    %v1848 = vperm.slane %v1846, 0
    %v1849 = vperm.slane %v1846, 1
    %vm1852 = vcmask 228352
    %v1854 = vsel %vm1852, %v1845, 0
    %vm1856 = vcmask 1043456
    %v1858 = vsel %vm1856, %v1843, 0
    %v1861 = vsel %vm1856, %v1844, 0
    %1863 = vmatpush.msra.mxu0 0.0
    %1864 = vmatpush.msra.mxu0 0.0
    %1865 = vmatpush.msra.mxu0 0.0
    %1866 = vmatpush.msra.mxu0 0.0
    %1867 = vmatpush.msra.mxu0 0.0
    %1868 = vmatpush.msra.mxu0 0.0
    %1869 = vmatpush.msra.mxu0 0.0
    %1870 = vmatpush.msra.mxu0 0.0
    %1871 = vmatpush.msra.mxu0 0.0
    %1872 = vmatpush.msra.mxu0 0.0
    %1873 = vmatpush.msra.mxu0 0.0
    %1874 = vmatpush.msra.mxu0 0.0
    %1875 = vmatpush.msra.mxu0 %v1858
    %1876 = vmatpush.msra.mxu0 %v1841
    %1877 = vmatpush.msra.mxu0 %v1839
    %1878 = vmatpush.msra.mxu0 %v1837
    %1879 = vmatmul.f32.gmra.mxu0 %v1854
    %v1880 = vpop.f32.mrf.mxu0
    %v1881 = vadd.f32 %v1848, %v1880
    %1882 = vdwg.mxu0
    %1883 = vmatpush.msra.mxu0 0.0
    %1884 = vmatpush.msra.mxu0 0.0
    %1885 = vmatpush.msra.mxu0 0.0
    %1886 = vmatpush.msra.mxu0 0.0
    %1887 = vmatpush.msra.mxu0 0.0
    %1888 = vmatpush.msra.mxu0 0.0
    %1889 = vmatpush.msra.mxu0 0.0
    %1890 = vmatpush.msra.mxu0 0.0
    %1891 = vmatpush.msra.mxu0 0.0
    %1892 = vmatpush.msra.mxu0 0.0
    %1893 = vmatpush.msra.mxu0 0.0
    %1894 = vmatpush.msra.mxu0 0.0
    %1895 = vmatpush.msra.mxu0 %v1861
    %1896 = vmatpush.msra.mxu0 %v1842
    %1897 = vmatpush.msra.mxu0 %v1840
    %1898 = vmatpush.msra.mxu0 %v1838
    %1899 = vmatmul.f32.gmra.mxu0 %v1854
    %v1900 = vpop.f32.mrf.mxu0
    %v1901 = vadd.f32 %v1849, %v1900
    %1902 = vdwg.mxu0
    %v1903 = vmax.f32 %v1881, 0.0
    %v1904 = vmax.f32 %v1901, 0.0
    %v1905 = vld [vmem:[%s13] sm:$0xff]
    %v1906 = vld [vmem:[%s13 + $0x8] sm:$0xff]
    %v1907 = vld [vmem:[%s13 + $0x10] sm:$0xff]
    %v1908 = vld [vmem:[%s13 + $0x18] sm:$0xff]
    %v1909 = vld [vmem:[%s13 + $0x20] sm:$0xff]
    %v1910 = vld [vmem:[%s13 + $0x28] sm:$0xff]
    %v1911 = vld [vmem:[%s13 + $0x30] sm:$0xff]
    %v1912 = vld [vmem:[%s13 + $0x38] sm:$0xff]
    %v1913 = vld [vmem:[%s13 + $0x40] sm:$0xff]
    %v1914 = vld [vmem:[%s13 + $0x48] sm:$0xff]
    %v1915 = vld [vmem:[%s13 + $0x50] sm:$0xff]
    %v1916 = vld [vmem:[%s13 + $0x58] sm:$0xff]
    %v1917 = vld [vmem:[%s13 + $0x60] sm:$0xff]
    %v1918 = vld [vmem:[%s13 + $0x68] sm:$0xff]
    %v1919 = vld [vmem:[%s13 + $0x70] sm:$0xff]
    %v1920 = vld [vmem:[%s13 + $0x78] sm:$0xff]
    %v1921 = vld [vmem:[%s13 + $0x80] sm:$0xff]
    %v1922 = vld [vmem:[%s13 + $0x88] sm:$0xff]
    %v1923 = vld [vmem:[%s13 + $0x90] sm:$0xff]
    %v1924 = vld [vmem:[%s13 + $0x98] sm:$0xff]
    %v1925 = vld [vmem:[%s13 + $0xa0] sm:$0xff]
    %v1926 = vld [vmem:[%s13 + $0xa8] sm:$0xff]
    %v1927 = vld [vmem:[%s13 + $0xb0] sm:$0xff]
    %v1928 = vld [vmem:[%s13 + $0xb8] sm:$0xff]
    %v1929 = vld [vmem:[%s13 + $0xc0] sm:$0xff]
    %v1930 = vld [vmem:[%s13 + $0xc8] sm:$0xff]
    %v1931 = vld [vmem:[%s13 + $0xd0] sm:$0xff]
    %v1932 = vld [vmem:[%s13 + $0xd8] sm:$0xff]
    %v1933 = vld [vmem:[%s13 + $0xe0] sm:$0xff]
    %v1934 = vld [vmem:[%s13 + $0xe8] sm:$0xff]
    %v1935 = vld [vmem:[%s13 + $0xf0] sm:$0xff]
    %v1936 = vld [vmem:[%s13 + $0xf8] sm:$0xff]
    %v1937 = vld [vmem:[%s14] sm:$0x1]
    %v1939 = vperm.slane %v1937, 0
    %1941 = vmatpush.msra.mxu0 %v1920
    %1942 = vmatpush.msra.mxu0 %v1919
    %1943 = vmatpush.msra.mxu0 %v1918
    %1944 = vmatpush.msra.mxu0 %v1917
    %1945 = vmatpush.msra.mxu0 %v1916
    %1946 = vmatpush.msra.mxu0 %v1915
    %1947 = vmatpush.msra.mxu0 %v1914
    %1948 = vmatpush.msra.mxu0 %v1913
    %1949 = vmatpush.msra.mxu0 %v1912
    %1950 = vmatpush.msra.mxu0 %v1911
    %1951 = vmatpush.msra.mxu0 %v1910
    %1952 = vmatpush.msra.mxu0 %v1909
    %1953 = vmatpush.msra.mxu0 %v1908
    %1954 = vmatpush.msra.mxu0 %v1907
    %1955 = vmatpush.msra.mxu0 %v1906
    %1956 = vmatpush.msra.mxu0 %v1905
    %1957 = vmatmul.f32.gmra.mxu0 %v1903
    %v1958 = vpop.f32.mrf.mxu0
    %v1959 = vadd.f32 %v1939, %v1958
    %1960 = vdwg.mxu0
    %1961 = vmatpush.msra.mxu0 %v1936
    %1962 = vmatpush.msra.mxu0 %v1935
    %1963 = vmatpush.msra.mxu0 %v1934
    %1964 = vmatpush.msra.mxu0 %v1933
    %1965 = vmatpush.msra.mxu0 %v1932
    %1966 = vmatpush.msra.mxu0 %v1931
    %1967 = vmatpush.msra.mxu0 %v1930
    %1968 = vmatpush.msra.mxu0 %v1929
    %1969 = vmatpush.msra.mxu0 %v1928
    %1970 = vmatpush.msra.mxu0 %v1927
    %1971 = vmatpush.msra.mxu0 %v1926
    %1972 = vmatpush.msra.mxu0 %v1925
    %1973 = vmatpush.msra.mxu0 %v1924
    %1974 = vmatpush.msra.mxu0 %v1923
    %1975 = vmatpush.msra.mxu0 %v1922
    %1976 = vmatpush.msra.mxu0 %v1921
    %1977 = vmatmul.f32.gmra.mxu0 %v1904
    %v1978 = vpop.f32.mrf.mxu0
    %v1979 = vadd.f32 %v1959, %v1978
    %1980 = vdwg.mxu0
    %vm1981 = vcmask 9216
    %v1982 = vsel %vm1981, %v1979, -inf
    %1983 = vmax.xlane.f32.xlu0 %v1982
    %v1984 = vpop.xlane.xlu0 %1983
    %v1985 = vsub.f32 %v1979, %v1984
    %v1986 = vmul.f32 %v1985, 1.442695
    %v1987 = vpow.pop %v1986
    %v1988 = vsel %vm1981, %v1987, 0.0
    %1989 = vadd.xlane.f32.xlu0 %v1988
    %v1990 = vpop.xlane.xlu0 %1989
    %v1991 = vrcp.pop %v1990
    %v1992 = vmul.f32 %v1990, %v1991
    %v1993 = vsub.f32 1.0, %v1992
    %v1994 = vmul.f32 %v1991, %v1993
    %v1995 = vadd.f32 %v1991, %v1994
    %vm1996 = vweird.f32 %v1990
    %vm1997 = vweird.f32 %v1991
    %vm1998 = vmor %vm1996, %vm1997
    %v1999 = vsel %vm1998, %v1991, %v1995
    %v2000 = vand.u32 2147483647, %v1990
    %vm2001 = vcmp.eq.f32.partialorder %v2000, 8.507059e+37
    %v2002 = vand.u32 %v1990, 2147483648
    %v2003 = vor.u32 1.1754944e-38, %v2002
    %v2004 = vsel %vm2001, %v2003, %v1999
    %v2005 = vmul.f32 %v1987, %v2004
    %2006 = vst.msk [vmem:[#allocation2] sm:$0x3] %vm1981, %v2005
    // Predicated region
    $region62: #{pure_cnn_forward.1} parent=1 // pred_check
      _
    $region63: #{pure_cnn_forward.1} parent=1 // pred_check_branch
      %2008 = sbr.rel (0) target = $region65
    $region64: #{pure_cnn_forward.1} parent=1 // pred_region
      %2010 = vsyncadd [#allocation3], 0
      %s2012 = sshll.u32 [#allocation2], 4
      %s2013 = int_to_ptr.vmem [resolvable:$true] %s2012
      %s2014 = sshll.u32 %s15, 4
      %s2015 = int_to_ptr.hbm [resolvable:$true] %s2014
      %2017 = dma.vmem_to_hbm [thread:$0]  %s2013, 32, %s2015, [#allocation3]
    $region65: #{pure_cnn_forward.1} parent=1 // pred_fallthru
      _
    // Predicated region
    $region66: #{pure_cnn_forward.1} parent=1 // pred_check
      _
    $region67: #{pure_cnn_forward.1} parent=1 // pred_check_branch
      %2019 = sbr.rel (0) target = $region69
    $region68: #{pure_cnn_forward.1} parent=1 // pred_region
      %2021 = dma.done [#allocation3], 32
    $region69: #{pure_cnn_forward.1} parent=1 // pred_fallthru
      _
    %2022 = vsyncpa [#allocation3], 1

</llo_original>
